<compile_context>
chip_gen: v7x
topology: tpu7x:2x2x1
jax: 0.10.0
libtpu: 0.0.40
codegen_flags: <defaults>
</compile_context>

<pallas_src>
import functools
import math

import jax
import jax.numpy as jnp
from jax.experimental import pallas as pl
from jax.experimental.pallas import tpu as pltpu

LANE = 128  # lane width: padded feature dims are multiples of this


def _round_up(x, m):
    return ((x + m - 1) // m) * m


def _pad2(a, rows, cols):
    r, c = a.shape
    if r == rows and c == cols:
        return a
    return jnp.pad(a, ((0, rows - r), (0, cols - c)))


def _vmem_capacity_bytes():
    try:
        return int(pltpu.get_tpu_info().vmem_capacity_bytes)
    except Exception:
        return 64 * 1024 * 1024  # conservative: v7x per-TensorCore VMEM


def _param_spec(shape, index_map, single_buffer):
    # Constant index_map => the block never changes; double-buffering it only
    # doubles resident VMEM without overlapping anything.
    if single_buffer:
        return pl.BlockSpec(shape, index_map, pipeline_mode=pl.Buffered(1))
    return pl.BlockSpec(shape, index_map)


# ----------------------------------------------------------------------------
# Kernels
# ----------------------------------------------------------------------------
def _make_resident_kernel(num_hidden_layers, compute_dtype):
    """All weights VMEM-resident; refs = (x, Wi, bi, W0, b0, ..., Wo, bo, out)."""

    def kernel(*refs):
        x_ref = refs[0]
        out_ref = refs[-1]
        params = refs[1:-1]

        def layer(h, w_ref, b_ref, act):
            acc = jnp.dot(h, w_ref[...], preferred_element_type=jnp.float32)
            acc = acc + b_ref[...]            # bias kept in f32
            if act:
                acc = jnp.maximum(acc, 0.0)   # ReLU
            return acc

        # Cast to the compute dtype inside the kernel (no HBM-side copy).
        h = x_ref[...].astype(compute_dtype)
        h = layer(h, params[0], params[1], act=True).astype(compute_dtype)
        for i in range(num_hidden_layers):
            h = layer(h, params[2 + 2 * i], params[3 + 2 * i],
                      act=True).astype(compute_dtype)
        out_ref[...] = layer(h, params[-2], params[-1],
                             act=False).astype(out_ref.dtype)

    return kernel


def _make_streamed_kernel(num_hidden_layers, compute_dtype):
    """Hidden layers streamed over grid axis 1; activation carried in scratch."""

    def kernel(x_ref, wi_ref, bi_ref, wh_ref, bh_ref, wo_ref, bo_ref,
               out_ref, h_ref):
        l = pl.program_id(1)

        @pl.when(l == 0)
        def _():
            a = jnp.dot(x_ref[...].astype(compute_dtype), wi_ref[...],
                        preferred_element_type=jnp.float32)
            a = jnp.maximum(a + bi_ref[...], 0.0)
            h_ref[...] = a.astype(h_ref.dtype)

        # Hidden layer l (weight block streamed in for this grid step).
        a = jnp.dot(h_ref[...], wh_ref[...],
                    preferred_element_type=jnp.float32)
        a = jnp.maximum(a + bh_ref[...], 0.0)
        h_ref[...] = a.astype(h_ref.dtype)

        @pl.when(l == num_hidden_layers - 1)
        def _():
            o = jnp.dot(h_ref[...], wo_ref[...],
                        preferred_element_type=jnp.float32)
            out_ref[...] = (o + bo_ref[...]).astype(out_ref.dtype)

    return kernel


# ----------------------------------------------------------------------------
# Forward wrapper
# ----------------------------------------------------------------------------
@functools.partial(
    jax.jit,
    static_argnames=("num_layers", "tile_b", "compute_dtype", "out_dtype",
                     "single_buffer_params", "force_stream"))
def _fwfnn_forward_impl(x, params, num_layers, *, tile_b, compute_dtype,
                        out_dtype, single_buffer_params, force_stream):
    batch, num_inputs = x.shape
    weights = params[0::2]
    biases = params[1::2]
    width = weights[0].shape[1]
    num_outputs = weights[-1].shape[1]
    if out_dtype is None:
        out_dtype = x.dtype

    width_pad = _round_up(width, LANE)
    out_pad = _round_up(num_outputs, LANE)

    cdt_size = jnp.dtype(compute_dtype).itemsize
    out_size = jnp.dtype(out_dtype).itemsize
    x_size = x.dtype.itemsize

    # ---- batch tiling: dtype-aware sublane, >=2 tiles when batch allows so
    # both v7x TensorCores get work under the "parallel" batch axis. ----------
    sub = 16 if (cdt_size < 4 or out_size < 4) else 8
    tile_b = max(sub, _round_up(tile_b, sub))
    batch_pad0 = _round_up(batch, sub)
    if batch_pad0 >= 2 * sub:
        tb = min(tile_b, _round_up((batch_pad0 + 1) // 2, sub))
    else:
        tb = batch_pad0
    batch_pad = _round_up(batch, tb)
    n_tiles = batch_pad // tb

    # Only the batch axis is (rarely) zero-padded; feature dim / dtype of x are
    # untouched in HBM — cast happens inside the kernel.
    x_p = x if batch_pad == batch else jnp.pad(x, ((0, batch_pad - batch), (0, 0)))

    # ---- pad parameters (feature dims only; zero padding is exact through
    # ReLU so padded lanes never contribute). ---------------------------------
    wi = _pad2(weights[0], num_inputs, width_pad).astype(compute_dtype)
    bi = _pad2(biases[0].reshape(1, -1), 1, width_pad).astype(jnp.float32)
    hidden_w = [_pad2(w, width_pad, width_pad).astype(compute_dtype)
                for w in weights[1:1 + num_layers]]
    hidden_b = [_pad2(b.reshape(1, -1), 1, width_pad).astype(jnp.float32)
                for b in biases[1:1 + num_layers]]
    wo = _pad2(weights[-1], width_pad, out_pad).astype(compute_dtype)
    bo = _pad2(biases[-1].reshape(1, -1), 1, out_pad).astype(jnp.float32)

    def nbytes(a):
        return math.prod(a.shape) * a.dtype.itemsize

    small_param_bytes = nbytes(wi) + nbytes(bi) + nbytes(wo) + nbytes(bo)
    hidden_param_bytes = sum(nbytes(w) + nbytes(b)
                             for w, b in zip(hidden_w, hidden_b))
    all_param_bytes = small_param_bytes + hidden_param_bytes

    # ---- generation-aware VMEM budget ---------------------------------------
    vmem_cap = max(_vmem_capacity_bytes() - 8 * 1024 * 1024, 16 * 1024 * 1024)
    use_stream = (num_layers > 0) and (
        force_stream or all_param_bytes > 0.45 * vmem_cap)

    x_io = 2 * tb * num_inputs * x_size            # double-buffered input tiles
    out_io = 2 * tb * out_pad * out_size           # double-buffered output tiles
    max_pad = max(width_pad, out_pad)
    acc_bytes = 3 * tb * max_pad * 4               # f32 layer accumulators etc.
    slack = 2 * 1024 * 1024

    flops = 2 * batch_pad * (num_inputs * width_pad
                             + num_layers * width_pad * width_pad
                             + width_pad * out_pad)

    def clamp_vmem(need):
        return int(max(min(need, vmem_cap), min(32 * 1024 * 1024, vmem_cap)))

    if not use_stream:
        # -------- fully-resident path ----------------------------------------
        padded_params = [wi, bi]
        for w, b in zip(hidden_w, hidden_b):
            padded_params += [w, b]
        padded_params += [wo, bo]

        param_vmem = (1 if single_buffer_params else 2) * all_param_bytes
        vmem_limit = clamp_vmem(x_io + out_io + param_vmem + acc_bytes + slack)

        in_specs = [pl.BlockSpec((tb, num_inputs), lambda i: (i, 0))]
        for p in padded_params:
            in_specs.append(_param_spec(p.shape, lambda i: (0, 0),
                                        single_buffer_params))
        out_spec = pl.BlockSpec((tb, out_pad), lambda i: (i, 0))

        cost = pl.CostEstimate(
            flops=flops, transcendentals=0,
            bytes_accessed=(batch_pad * num_inputs * x_size
                            + batch_pad * out_pad * out_size
                            + all_param_bytes))

        out_p = pl.pallas_call(
            _make_resident_kernel(num_layers, compute_dtype),
            out_shape=jax.ShapeDtypeStruct((batch_pad, out_pad), out_dtype),
            grid=(n_tiles,),
            in_specs=in_specs,
            out_specs=out_spec,
            compiler_params=pltpu.CompilerParams(
                dimension_semantics=("parallel",),
                vmem_limit_bytes=vmem_limit),
            cost_estimate=cost,
        )(x_p, *padded_params)
    else:
        # -------- layer-streaming path ----------------------------------------
        wh = jnp.stack(hidden_w, axis=0)           # (L, width_pad, width_pad)
        bh = jnp.stack(hidden_b, axis=0)           # (L, 1, width_pad)

        wh_vmem = 2 * (width_pad * width_pad * cdt_size + width_pad * 4)
        small_vmem = (1 if single_buffer_params else 2) * small_param_bytes
        h_vmem = tb * width_pad * cdt_size
        vmem_limit = clamp_vmem(x_io + out_io + wh_vmem + small_vmem
                                + h_vmem + acc_bytes + slack)

        in_specs = [
            pl.BlockSpec((tb, num_inputs), lambda i, l: (i, 0)),
            _param_spec(wi.shape, lambda i, l: (0, 0), single_buffer_params),
            _param_spec(bi.shape, lambda i, l: (0, 0), single_buffer_params),
            pl.BlockSpec((None, width_pad, width_pad), lambda i, l: (l, 0, 0)),
            pl.BlockSpec((None, 1, width_pad), lambda i, l: (l, 0, 0)),
            _param_spec(wo.shape, lambda i, l: (0, 0), single_buffer_params),
            _param_spec(bo.shape, lambda i, l: (0, 0), single_buffer_params),
        ]
        out_spec = pl.BlockSpec((tb, out_pad), lambda i, l: (i, 0))

        cost = pl.CostEstimate(
            flops=flops, transcendentals=0,
            bytes_accessed=(batch_pad * num_inputs * x_size
                            + batch_pad * out_pad * out_size
                            + small_param_bytes + n_tiles * hidden_param_bytes))

        out_p = pl.pallas_call(
            _make_streamed_kernel(num_layers, compute_dtype),
            out_shape=jax.ShapeDtypeStruct((batch_pad, out_pad), out_dtype),
            grid=(n_tiles, num_layers),
            in_specs=in_specs,
            out_specs=out_spec,
            scratch_shapes=[pltpu.VMEM((tb, width_pad), compute_dtype)],
            compiler_params=pltpu.CompilerParams(
                dimension_semantics=("parallel", "arbitrary"),
                vmem_limit_bytes=vmem_limit),
            cost_estimate=cost,
        )(x_p, wi, bi, wh, bh, wo, bo)

    # Slice lane/batch padding off outside the kernel.
    return out_p[:batch, :num_outputs]


def fwfnn_forward(x, params, num_layers, *, tile_b=256,
                  compute_dtype=jnp.bfloat16, out_dtype=None,
                  force_stream=False):
    """Fused FWFNN forward pass.

    params: flat tuple (Wi_t, bi, W0_t, b0, ..., Wo_t, bo); weights transposed
            to (in_features, out_features), biases (1, out_features).
    out_dtype: output dtype (default x.dtype); pass jnp.bfloat16 to halve the
            padded-output write stream when acceptable.
    """
    try:
        return _fwfnn_forward_impl(
            x, params, num_layers=num_layers, tile_b=tile_b,
            compute_dtype=compute_dtype, out_dtype=out_dtype,
            single_buffer_params=True, force_stream=force_stream)
    except Exception:
        # Fallback for JAX builds where pl.Buffered(1) on pallas_call
        # BlockSpecs is unsupported: default double-buffered parameters.
        return _fwfnn_forward_impl(
            x, params, num_layers=num_layers, tile_b=tile_b,
            compute_dtype=compute_dtype, out_dtype=out_dtype,
            single_buffer_params=False, force_stream=force_stream)


# ----------------------------------------------------------------------------
# Init + reference
# ----------------------------------------------------------------------------
def init_fwfnn_params(key, width, num_inputs, num_outputs, num_layers,
                      dtype=jnp.float32):
    """torch.nn.Linear-style init (uniform +/- 1/sqrt(fan_in)); weights stored
    transposed (in_features, out_features), biases (1, out_features)."""
    params = []
    dims = ([(num_inputs, width)] + [(width, width)] * num_layers
            + [(width, num_outputs)])
    for fan_in, fan_out in dims:
        key, kw, kb = jax.random.split(key, 3)
        bound = 1.0 / math.sqrt(fan_in)
        w_t = jax.random.uniform(kw, (fan_in, fan_out), dtype=dtype,
                                 minval=-bound, maxval=bound)
        b = jax.random.uniform(kb, (1, fan_out), dtype=dtype,
                               minval=-bound, maxval=bound)
        params += [w_t, b]
    return tuple(params)


def fwfnn_reference(x, params, num_layers, compute_dtype=jnp.bfloat16):
    """Pure-JAX reference following the same bf16-operand / f32-accumulate path."""
    weights = params[0::2]
    biases = params[1::2]
    h = x.astype(compute_dtype)
    n_lin = len(weights)
    for li, (w, b) in enumerate(zip(weights, biases)):
        acc = jnp.dot(h, w.astype(compute_dtype),
                      preferred_element_type=jnp.float32)
        acc = acc + b.reshape(1, -1).astype(jnp.float32)
        if li < n_lin - 1:
            acc = jnp.maximum(acc, 0.0)
            h = acc.astype(compute_dtype)
        else:
            h = acc
    return h.astype(x.dtype)


# TODO(synk): dropout (training-mode) is not implemented; the demo config uses
# dropout=None which is an identity in the forward pass.

if __name__ == "__main__":
    # FWFNN(width=32, num_inputs=16, num_outputs=8, num_layers=2,
    #       activation=relu, dropout=None); batch=64 exercises a 2-tile grid.
    width = 32
    num_inputs = 16
    num_outputs = 8
    num_layers = 2
    batch = 64

    key = jax.random.PRNGKey(0)
    key, kx, kp = jax.random.split(key, 3)
    x = jax.random.normal(kx, (batch, num_inputs), dtype=jnp.float32)
    params = init_fwfnn_params(kp, width, num_inputs, num_outputs, num_layers)

    ref = fwfnn_reference(x, params, num_layers)

    # 1) default fused path: VMEM-resident weights, batch-parallel grid.
    out = jax.block_until_ready(fwfnn_forward(x, params, num_layers))
    assert out.shape == (batch, num_outputs), out.shape
    assert out.dtype == x.dtype, out.dtype
    err = float(jnp.max(jnp.abs(out - ref)))
    assert err < 2e-3, f"resident path mismatch vs reference: {err}"

    # 2) layer-streaming path (hidden weights streamed over a grid axis).
    out_s = jax.block_until_ready(
        fwfnn_forward(x, params, num_layers, force_stream=True))
    err_s = float(jnp.max(jnp.abs(out_s - ref)))
    assert err_s < 2e-3, f"streamed path mismatch vs reference: {err_s}"

    # 3) bf16 output path (halves the padded-output write stream).
    out_b = jax.block_until_ready(
        fwfnn_forward(x, params, num_layers, out_dtype=jnp.bfloat16))
    err_b = float(jnp.max(jnp.abs(out_b.astype(jnp.float32) - ref)))
    assert err_b < 1e-2, f"bf16-output path mismatch vs reference: {err_b}"

    print("KERNEL_OK")
</pallas_src>

<mosaic_0001>
module attributes {stable_mosaic.version = 11 : i64} {
  func.func @kernel(%arg0: i32, %arg1: memref<32x16xf32, #tpu.memory_space<vmem>>, %arg2: memref<16x128xbf16, #tpu.memory_space<vmem>>, %arg3: memref<1x128xf32, #tpu.memory_space<vmem>>, %arg4: memref<128x128xbf16, #tpu.memory_space<vmem>>, %arg5: memref<1x128xf32, #tpu.memory_space<vmem>>, %arg6: memref<128x128xbf16, #tpu.memory_space<vmem>>, %arg7: memref<1x128xf32, #tpu.memory_space<vmem>>, %arg8: memref<128x128xbf16, #tpu.memory_space<vmem>>, %arg9: memref<1x128xf32, #tpu.memory_space<vmem>>, %arg10: memref<32x128xf32, #tpu.memory_space<vmem>>) attributes {dimension_semantics = [#tpu.dimension_semantics<parallel>], iteration_bounds = array<i64: 2>, scalar_prefetch = 0 : i64, scratch_operands = 0 : i64, tpu.core_type = #tpu.core_type<tc>, window_params = [{transform_indices = @transform_0, window_bounds = array<i64: 32, 16>}, {pipeline_mode = #tpu.pipeline_mode<synchronous>, transform_indices = @transform_1, window_bounds = array<i64: 16, 128>}, {pipeline_mode = #tpu.pipeline_mode<synchronous>, transform_indices = @transform_2, window_bounds = array<i64: 1, 128>}, {pipeline_mode = #tpu.pipeline_mode<synchronous>, transform_indices = @transform_3, window_bounds = array<i64: 128, 128>}, {pipeline_mode = #tpu.pipeline_mode<synchronous>, transform_indices = @transform_4, window_bounds = array<i64: 1, 128>}, {pipeline_mode = #tpu.pipeline_mode<synchronous>, transform_indices = @transform_5, window_bounds = array<i64: 128, 128>}, {pipeline_mode = #tpu.pipeline_mode<synchronous>, transform_indices = @transform_6, window_bounds = array<i64: 1, 128>}, {pipeline_mode = #tpu.pipeline_mode<synchronous>, transform_indices = @transform_7, window_bounds = array<i64: 128, 128>}, {pipeline_mode = #tpu.pipeline_mode<synchronous>, transform_indices = @transform_8, window_bounds = array<i64: 1, 128>}, {transform_indices = @transform_9, window_bounds = array<i64: 32, 128>}]} {
    %c0 = arith.constant 0 : index
    %c0_0 = arith.constant 0 : index
    %0 = vector.load %arg1[%c0, %c0_0] : memref<32x16xf32, #tpu.memory_space<vmem>>, vector<32x16xf32>
    %1 = arith.truncf %0 : vector<32x16xf32> to vector<32x16xbf16>
    %c0_1 = arith.constant 0 : index
    %c0_2 = arith.constant 0 : index
    %2 = vector.load %arg2[%c0_1, %c0_2] : memref<16x128xbf16, #tpu.memory_space<vmem>>, vector<16x128xbf16>
    %cst = arith.constant dense<0.000000e+00> : vector<32x128xf32>
    %3 = tpu.matmul %1, %2, %cst {dimension_numbers = #tpu.dot_dimension_numbers<[1], [0], [0], [1], [0, 0, 1, 1], [], []>} : vector<32x16xbf16>, vector<16x128xbf16>, vector<32x128xf32> -> vector<32x128xf32>
    %c0_3 = arith.constant 0 : index
    %c0_4 = arith.constant 0 : index
    %4 = vector.load %arg3[%c0_3, %c0_4] : memref<1x128xf32, #tpu.memory_space<vmem>>, vector<1x128xf32>
    %5 = vector.broadcast %4 : vector<1x128xf32> to vector<32x128xf32>
    %6 = arith.addf %3, %5 : vector<32x128xf32>
    %cst_5 = arith.constant 0.000000e+00 : f32
    %7 = vector.broadcast %cst_5 : f32 to vector<32x128xf32>
    %8 = arith.maximumf %6, %7 : vector<32x128xf32>
    %9 = arith.truncf %8 : vector<32x128xf32> to vector<32x128xbf16>
    %c0_6 = arith.constant 0 : index
    %c0_7 = arith.constant 0 : index
    %10 = vector.load %arg4[%c0_6, %c0_7] : memref<128x128xbf16, #tpu.memory_space<vmem>>, vector<128x128xbf16>
    %cst_8 = arith.constant dense<0.000000e+00> : vector<32x128xf32>
    %11 = tpu.matmul %9, %10, %cst_8 {dimension_numbers = #tpu.dot_dimension_numbers<[1], [0], [0], [1], [0, 0, 1, 1], [], []>} : vector<32x128xbf16>, vector<128x128xbf16>, vector<32x128xf32> -> vector<32x128xf32>
    %c0_9 = arith.constant 0 : index
    %c0_10 = arith.constant 0 : index
    %12 = vector.load %arg5[%c0_9, %c0_10] : memref<1x128xf32, #tpu.memory_space<vmem>>, vector<1x128xf32>
    %13 = vector.broadcast %12 : vector<1x128xf32> to vector<32x128xf32>
    %14 = arith.addf %11, %13 : vector<32x128xf32>
    %cst_11 = arith.constant 0.000000e+00 : f32
    %15 = vector.broadcast %cst_11 : f32 to vector<32x128xf32>
    %16 = arith.maximumf %14, %15 : vector<32x128xf32>
    %17 = arith.truncf %16 : vector<32x128xf32> to vector<32x128xbf16>
    %c0_12 = arith.constant 0 : index
    %c0_13 = arith.constant 0 : index
    %18 = vector.load %arg6[%c0_12, %c0_13] : memref<128x128xbf16, #tpu.memory_space<vmem>>, vector<128x128xbf16>
    %cst_14 = arith.constant dense<0.000000e+00> : vector<32x128xf32>
    %19 = tpu.matmul %17, %18, %cst_14 {dimension_numbers = #tpu.dot_dimension_numbers<[1], [0], [0], [1], [0, 0, 1, 1], [], []>} : vector<32x128xbf16>, vector<128x128xbf16>, vector<32x128xf32> -> vector<32x128xf32>
    %c0_15 = arith.constant 0 : index
    %c0_16 = arith.constant 0 : index
    %20 = vector.load %arg7[%c0_15, %c0_16] : memref<1x128xf32, #tpu.memory_space<vmem>>, vector<1x128xf32>
    %21 = vector.broadcast %20 : vector<1x128xf32> to vector<32x128xf32>
    %22 = arith.addf %19, %21 : vector<32x128xf32>
    %cst_17 = arith.constant 0.000000e+00 : f32
    %23 = vector.broadcast %cst_17 : f32 to vector<32x128xf32>
    %24 = arith.maximumf %22, %23 : vector<32x128xf32>
    %25 = arith.truncf %24 : vector<32x128xf32> to vector<32x128xbf16>
    %c0_18 = arith.constant 0 : index
    %c0_19 = arith.constant 0 : index
    %26 = vector.load %arg8[%c0_18, %c0_19] : memref<128x128xbf16, #tpu.memory_space<vmem>>, vector<128x128xbf16>
    %cst_20 = arith.constant dense<0.000000e+00> : vector<32x128xf32>
    %27 = tpu.matmul %25, %26, %cst_20 {dimension_numbers = #tpu.dot_dimension_numbers<[1], [0], [0], [1], [0, 0, 1, 1], [], []>} : vector<32x128xbf16>, vector<128x128xbf16>, vector<32x128xf32> -> vector<32x128xf32>
    %c0_21 = arith.constant 0 : index
    %c0_22 = arith.constant 0 : index
    %28 = vector.load %arg9[%c0_21, %c0_22] : memref<1x128xf32, #tpu.memory_space<vmem>>, vector<1x128xf32>
    %29 = vector.broadcast %28 : vector<1x128xf32> to vector<32x128xf32>
    %30 = arith.addf %27, %29 : vector<32x128xf32>
    %c0_23 = arith.constant 0 : index
    %c0_24 = arith.constant 0 : index
    %31 = vector.load %arg10[%c0_23, %c0_24] : memref<32x128xf32, #tpu.memory_space<vmem>>, vector<32x128xf32>
    tpu.vector_store %arg10[%c0_23, %c0_24], %30 {strides = array<i32>} : memref<32x128xf32, #tpu.memory_space<vmem>>, vector<32x128xf32>,
    return
  }
  func.func @transform_0(%arg0: i32) -> (i32, i32) {
    %c0_i32 = arith.constant 0 : i32
    %c0_i32_0 = arith.constant 0 : i32
    return %arg0, %c0_i32 : i32, i32
  }
  func.func @transform_1(%arg0: i32) -> (i32, i32) {
    %c0_i32 = arith.constant 0 : i32
    %c0_i32_0 = arith.constant 0 : i32
    %c0_i32_1 = arith.constant 0 : i32
    return %c0_i32, %c0_i32_0 : i32, i32
  }
  func.func @transform_2(%arg0: i32) -> (i32, i32) {
    %c0_i32 = arith.constant 0 : i32
    %c0_i32_0 = arith.constant 0 : i32
    %c0_i32_1 = arith.constant 0 : i32
    return %c0_i32, %c0_i32_0 : i32, i32
  }
  func.func @transform_3(%arg0: i32) -> (i32, i32) {
    %c0_i32 = arith.constant 0 : i32
    %c0_i32_0 = arith.constant 0 : i32
    %c0_i32_1 = arith.constant 0 : i32
    return %c0_i32, %c0_i32_0 : i32, i32
  }
  func.func @transform_4(%arg0: i32) -> (i32, i32) {
    %c0_i32 = arith.constant 0 : i32
    %c0_i32_0 = arith.constant 0 : i32
    %c0_i32_1 = arith.constant 0 : i32
    return %c0_i32, %c0_i32_0 : i32, i32
  }
  func.func @transform_5(%arg0: i32) -> (i32, i32) {
    %c0_i32 = arith.constant 0 : i32
    %c0_i32_0 = arith.constant 0 : i32
    %c0_i32_1 = arith.constant 0 : i32
    return %c0_i32, %c0_i32_0 : i32, i32
  }
  func.func @transform_6(%arg0: i32) -> (i32, i32) {
    %c0_i32 = arith.constant 0 : i32
    %c0_i32_0 = arith.constant 0 : i32
    %c0_i32_1 = arith.constant 0 : i32
    return %c0_i32, %c0_i32_0 : i32, i32
  }
  func.func @transform_7(%arg0: i32) -> (i32, i32) {
    %c0_i32 = arith.constant 0 : i32
    %c0_i32_0 = arith.constant 0 : i32
    %c0_i32_1 = arith.constant 0 : i32
    return %c0_i32, %c0_i32_0 : i32, i32
  }
  func.func @transform_8(%arg0: i32) -> (i32, i32) {
    %c0_i32 = arith.constant 0 : i32
    %c0_i32_0 = arith.constant 0 : i32
    %c0_i32_1 = arith.constant 0 : i32
    return %c0_i32, %c0_i32_0 : i32, i32
  }
  func.func @transform_9(%arg0: i32) -> (i32, i32) {
    %c0_i32 = arith.constant 0 : i32
    %c0_i32_0 = arith.constant 0 : i32
    return %arg0, %c0_i32 : i32, i32
  }
}

module attributes {stable_mosaic.version = 11 : i64} {
  func.func @kernel(%arg0: i32, %arg1: memref<32x16xf32, #tpu.memory_space<vmem>>, %arg2: memref<16x128xbf16, #tpu.memory_space<vmem>>, %arg3: memref<1x128xf32, #tpu.memory_space<vmem>>, %arg4: memref<128x128xbf16, #tpu.memory_space<vmem>>, %arg5: memref<1x128xf32, #tpu.memory_space<vmem>>, %arg6: memref<128x128xbf16, #tpu.memory_space<vmem>>, %arg7: memref<1x128xf32, #tpu.memory_space<vmem>>, %arg8: memref<128x128xbf16, #tpu.memory_space<vmem>>, %arg9: memref<1x128xf32, #tpu.memory_space<vmem>>, %arg10: memref<32x128xf32, #tpu.memory_space<vmem>>) attributes {dimension_semantics = [#tpu.dimension_semantics<parallel>], iteration_bounds = array<i64: 2>, scalar_prefetch = 0 : i64, scratch_operands = 0 : i64, tpu.core_type = #tpu.core_type<tc>, window_params = [{transform_indices = @transform_0, window_bounds = array<i64: 32, 16>}, {pipeline_mode = #tpu.pipeline_mode<synchronous>, transform_indices = @transform_1, window_bounds = array<i64: 16, 128>}, {pipeline_mode = #tpu.pipeline_mode<synchronous>, transform_indices = @transform_2, window_bounds = array<i64: 1, 128>}, {pipeline_mode = #tpu.pipeline_mode<synchronous>, transform_indices = @transform_3, window_bounds = array<i64: 128, 128>}, {pipeline_mode = #tpu.pipeline_mode<synchronous>, transform_indices = @transform_4, window_bounds = array<i64: 1, 128>}, {pipeline_mode = #tpu.pipeline_mode<synchronous>, transform_indices = @transform_5, window_bounds = array<i64: 128, 128>}, {pipeline_mode = #tpu.pipeline_mode<synchronous>, transform_indices = @transform_6, window_bounds = array<i64: 1, 128>}, {pipeline_mode = #tpu.pipeline_mode<synchronous>, transform_indices = @transform_7, window_bounds = array<i64: 128, 128>}, {pipeline_mode = #tpu.pipeline_mode<synchronous>, transform_indices = @transform_8, window_bounds = array<i64: 1, 128>}, {transform_indices = @transform_9, window_bounds = array<i64: 32, 128>}]} {
    %c0 = arith.constant 0 : index
    %c0_0 = arith.constant 0 : index
    %0 = vector.load %arg1[%c0, %c0_0] : memref<32x16xf32, #tpu.memory_space<vmem>>, vector<32x16xf32>
    %1 = arith.truncf %0 : vector<32x16xf32> to vector<32x16xbf16>
    %c0_1 = arith.constant 0 : index
    %c0_2 = arith.constant 0 : index
    %2 = vector.load %arg2[%c0_1, %c0_2] : memref<16x128xbf16, #tpu.memory_space<vmem>>, vector<16x128xbf16>
    %cst = arith.constant dense<0.000000e+00> : vector<32x128xf32>
    %3 = tpu.matmul %1, %2, %cst {dimension_numbers = #tpu.dot_dimension_numbers<[1], [0], [0], [1], [0, 0, 1, 1], [], []>} : vector<32x16xbf16>, vector<16x128xbf16>, vector<32x128xf32> -> vector<32x128xf32>
    %c0_3 = arith.constant 0 : index
    %c0_4 = arith.constant 0 : index
    %4 = vector.load %arg3[%c0_3, %c0_4] : memref<1x128xf32, #tpu.memory_space<vmem>>, vector<1x128xf32>
    %5 = vector.broadcast %4 : vector<1x128xf32> to vector<32x128xf32>
    %6 = arith.addf %3, %5 : vector<32x128xf32>
    %cst_5 = arith.constant 0.000000e+00 : f32
    %7 = vector.broadcast %cst_5 : f32 to vector<32x128xf32>
    %8 = arith.maximumf %6, %7 : vector<32x128xf32>
    %9 = arith.truncf %8 : vector<32x128xf32> to vector<32x128xbf16>
    %c0_6 = arith.constant 0 : index
    %c0_7 = arith.constant 0 : index
    %10 = vector.load %arg4[%c0_6, %c0_7] : memref<128x128xbf16, #tpu.memory_space<vmem>>, vector<128x128xbf16>
    %cst_8 = arith.constant dense<0.000000e+00> : vector<32x128xf32>
    %11 = tpu.matmul %9, %10, %cst_8 {dimension_numbers = #tpu.dot_dimension_numbers<[1], [0], [0], [1], [0, 0, 1, 1], [], []>} : vector<32x128xbf16>, vector<128x128xbf16>, vector<32x128xf32> -> vector<32x128xf32>
    %c0_9 = arith.constant 0 : index
    %c0_10 = arith.constant 0 : index
    %12 = vector.load %arg5[%c0_9, %c0_10] : memref<1x128xf32, #tpu.memory_space<vmem>>, vector<1x128xf32>
    %13 = vector.broadcast %12 : vector<1x128xf32> to vector<32x128xf32>
    %14 = arith.addf %11, %13 : vector<32x128xf32>
    %cst_11 = arith.constant 0.000000e+00 : f32
    %15 = vector.broadcast %cst_11 : f32 to vector<32x128xf32>
    %16 = arith.maximumf %14, %15 : vector<32x128xf32>
    %17 = arith.truncf %16 : vector<32x128xf32> to vector<32x128xbf16>
    %c0_12 = arith.constant 0 : index
    %c0_13 = arith.constant 0 : index
    %18 = vector.load %arg6[%c0_12, %c0_13] : memref<128x128xbf16, #tpu.memory_space<vmem>>, vector<128x128xbf16>
    %cst_14 = arith.constant dense<0.000000e+00> : vector<32x128xf32>
    %19 = tpu.matmul %17, %18, %cst_14 {dimension_numbers = #tpu.dot_dimension_numbers<[1], [0], [0], [1], [0, 0, 1, 1], [], []>} : vector<32x128xbf16>, vector<128x128xbf16>, vector<32x128xf32> -> vector<32x128xf32>
    %c0_15 = arith.constant 0 : index
    %c0_16 = arith.constant 0 : index
    %20 = vector.load %arg7[%c0_15, %c0_16] : memref<1x128xf32, #tpu.memory_space<vmem>>, vector<1x128xf32>
    %21 = vector.broadcast %20 : vector<1x128xf32> to vector<32x128xf32>
    %22 = arith.addf %19, %21 : vector<32x128xf32>
    %cst_17 = arith.constant 0.000000e+00 : f32
    %23 = vector.broadcast %cst_17 : f32 to vector<32x128xf32>
    %24 = arith.maximumf %22, %23 : vector<32x128xf32>
    %25 = arith.truncf %24 : vector<32x128xf32> to vector<32x128xbf16>
    %c0_18 = arith.constant 0 : index
    %c0_19 = arith.constant 0 : index
    %26 = vector.load %arg8[%c0_18, %c0_19] : memref<128x128xbf16, #tpu.memory_space<vmem>>, vector<128x128xbf16>
    %cst_20 = arith.constant dense<0.000000e+00> : vector<32x128xf32>
    %27 = tpu.matmul %25, %26, %cst_20 {dimension_numbers = #tpu.dot_dimension_numbers<[1], [0], [0], [1], [0, 0, 1, 1], [], []>} : vector<32x128xbf16>, vector<128x128xbf16>, vector<32x128xf32> -> vector<32x128xf32>
    %c0_21 = arith.constant 0 : index
    %c0_22 = arith.constant 0 : index
    %28 = vector.load %arg9[%c0_21, %c0_22] : memref<1x128xf32, #tpu.memory_space<vmem>>, vector<1x128xf32>
    %29 = vector.broadcast %28 : vector<1x128xf32> to vector<32x128xf32>
    %30 = arith.addf %27, %29 : vector<32x128xf32>
    %c0_23 = arith.constant 0 : index
    %c0_24 = arith.constant 0 : index
    %31 = vector.load %arg10[%c0_23, %c0_24] : memref<32x128xf32, #tpu.memory_space<vmem>>, vector<32x128xf32>
    tpu.vector_store %arg10[%c0_23, %c0_24], %30 {strides = array<i32>} : memref<32x128xf32, #tpu.memory_space<vmem>>, vector<32x128xf32>,
    return
  }
  func.func @transform_0(%arg0: i32) -> (i32, i32) {
    %c0_i32 = arith.constant 0 : i32
    %c0_i32_0 = arith.constant 0 : i32
    return %arg0, %c0_i32 : i32, i32
  }
  func.func @transform_1(%arg0: i32) -> (i32, i32) {
    %c0_i32 = arith.constant 0 : i32
    %c0_i32_0 = arith.constant 0 : i32
    %c0_i32_1 = arith.constant 0 : i32
    return %c0_i32, %c0_i32_0 : i32, i32
  }
  func.func @transform_2(%arg0: i32) -> (i32, i32) {
    %c0_i32 = arith.constant 0 : i32
    %c0_i32_0 = arith.constant 0 : i32
    %c0_i32_1 = arith.constant 0 : i32
    return %c0_i32, %c0_i32_0 : i32, i32
  }
  func.func @transform_3(%arg0: i32) -> (i32, i32) {
    %c0_i32 = arith.constant 0 : i32
    %c0_i32_0 = arith.constant 0 : i32
    %c0_i32_1 = arith.constant 0 : i32
    return %c0_i32, %c0_i32_0 : i32, i32
  }
  func.func @transform_4(%arg0: i32) -> (i32, i32) {
    %c0_i32 = arith.constant 0 : i32
    %c0_i32_0 = arith.constant 0 : i32
    %c0_i32_1 = arith.constant 0 : i32
    return %c0_i32, %c0_i32_0 : i32, i32
  }
  func.func @transform_5(%arg0: i32) -> (i32, i32) {
    %c0_i32 = arith.constant 0 : i32
    %c0_i32_0 = arith.constant 0 : i32
    %c0_i32_1 = arith.constant 0 : i32
    return %c0_i32, %c0_i32_0 : i32, i32
  }
  func.func @transform_6(%arg0: i32) -> (i32, i32) {
    %c0_i32 = arith.constant 0 : i32
    %c0_i32_0 = arith.constant 0 : i32
    %c0_i32_1 = arith.constant 0 : i32
    return %c0_i32, %c0_i32_0 : i32, i32
  }
  func.func @transform_7(%arg0: i32) -> (i32, i32) {
    %c0_i32 = arith.constant 0 : i32
    %c0_i32_0 = arith.constant 0 : i32
    %c0_i32_1 = arith.constant 0 : i32
    return %c0_i32, %c0_i32_0 : i32, i32
  }
  func.func @transform_8(%arg0: i32) -> (i32, i32) {
    %c0_i32 = arith.constant 0 : i32
    %c0_i32_0 = arith.constant 0 : i32
    %c0_i32_1 = arith.constant 0 : i32
    return %c0_i32, %c0_i32_0 : i32, i32
  }
  func.func @transform_9(%arg0: i32) -> (i32, i32) {
    %c0_i32 = arith.constant 0 : i32
    %c0_i32_0 = arith.constant 0 : i32
    return %arg0, %c0_i32 : i32, i32
  }
}

</mosaic_0001>

<llo_original>
// kernel: _fwfnn_forward_impl.1
$region0: #{_fwfnn_forward_impl.1}
  #allocation0 [shape = 'u32[]', space=smem, size = 0x4, offset = 0x4, fixed_abs, tag = 'smem constant byte address 0x4 - core index']
  #allocation1 [shape = 'u32[144,128]{1,0:T(1,128)}', space=vmem, size = 0x12000, scoped, tag = 'internal scratch']
  %s0 = inlined_call_operand.vmem [shape: f32[64,16], index: 0, kind: input, shape index: {}]
  %s1 = inlined_call_operand.vmem [shape: bf16[16,128], index: 1, kind: input, shape index: {}]
  %s2 = inlined_call_operand.vmem [shape: f32[1,128], index: 2, kind: input, shape index: {}]
  %s3 = inlined_call_operand.vmem [shape: bf16[128,128], index: 3, kind: input, shape index: {}]
  %s4 = inlined_call_operand.vmem [shape: f32[1,128], index: 4, kind: input, shape index: {}]
  %s5 = inlined_call_operand.vmem [shape: bf16[128,128], index: 5, kind: input, shape index: {}]
  %s6 = inlined_call_operand.vmem [shape: f32[1,128], index: 6, kind: input, shape index: {}]
  %s7 = inlined_call_operand.vmem [shape: bf16[128,128], index: 7, kind: input, shape index: {}]
  %s8 = inlined_call_operand.vmem [shape: f32[1,128], index: 8, kind: input, shape index: {}]
  %s9 = inlined_call_operand.vmem [shape: f32[64,128], index: 9, kind: output, shape index: {}]
  %s10 = sld [smem:[#allocation0]]
  $region69: #{_fwfnn_forward_impl.1} parent=0
    _
  %s12 = ssub.s32 1, %s10
  %s13 = scalar_select 0, %s12, %s10
  loop: start=0, step=1, limit=4
  $region2: #{_fwfnn_forward_impl.1} parent=0 // loop_pre_header
    _
  $region3: #{_fwfnn_forward_impl.1} parent=0 // loop_header
    %s15 = sphi 0, %s19
    %p16 = scmp.ge.s32.totalorder %s15, 4
    %s25 = sphi 0, %s27
    %s28 = sphi 0, %s25
    %s29 = sphi 0, %s28
    %s45 = sphi 0, %s29
    %s49 = sphi 0, %s49
    %s51 = sphi 0, %s49
    %s52 = sphi 0, %s51
    %s66 = sphi 0, %s52
    %s70 = sphi 0, %s70
    %s72 = sphi 0, %s70
    %s73 = sphi 0, %s72
    %s87 = sphi 0, %s73
    %s91 = sphi 0, %s91
    %s93 = sphi 0, %s91
    %s94 = sphi 0, %s93
    %s108 = sphi 0, %s94
    %s112 = sphi 0, %s112
    %s114 = sphi 0, %s112
    %s115 = sphi 0, %s114
    %s129 = sphi 0, %s115
    %s133 = sphi 0, %s133
    %s135 = sphi 0, %s133
    %s136 = sphi 0, %s135
    %s150 = sphi 0, %s136
    %s154 = sphi 0, %s154
    %s156 = sphi 0, %s154
    %s157 = sphi 0, %s156
    %s171 = sphi 0, %s157
    %s175 = sphi 0, %s175
    %s177 = sphi 0, %s175
    %s178 = sphi 0, %s177
    %s192 = sphi 0, %s178
    %s196 = sphi 0, %s196
    %s198 = sphi 0, %s196
    %s199 = sphi 0, %s198
    %s213 = sphi 0, %s199
    %s219 = sphi 0, %s221
    %s222 = sphi 0, %s219
    %s223 = sphi 0, %s222
    %s239 = sphi 0, %s223
  $region4: #{_fwfnn_forward_impl.1} parent=0 // loop_header_branch
    %18 = sbr.rel (%p16) target = $region8
  $region5: #{_fwfnn_forward_impl.1} parent=0 // loop_body
    %s20 = ssub.s32 %s15, 1
    %s21 = ssub.s32 %s15, 2
    %s22 = sadd.s32 %s15, 1
    %s23 = ssub.s32 %s15, %s22
    %p24 = scmp.eq.s32.totalorder %s23, 0
    %s26 = sadd.s32 %s25, 1
    %s27 = scalar_select %p24, %s25, %s26
    %p30 = pneg %p24
    %p31 = scmp.eq.s32.totalorder %s15, 1
    %p32 = por %p30, %p31
    %p33 = scmp.ne.s32.totalorder %s25, %s28
    %p34 = scmp.eq.s32.totalorder %s15, 0
    %p35 = por %p33, %p34
    %p36 = scmp.ne.s32.totalorder %s25, %s28
    %p37 = scmp.eq.s32.totalorder %s20, 1
    %p38 = por %p36, %p37
    %p39 = scmp.ne.s32.totalorder %s28, %s29
    %p40 = scmp.eq.s32.totalorder %s20, 0
    %p41 = por %p39, %p40
    %p42 = scmp.ne.s32.totalorder %s28, %s29
    %p43 = scmp.eq.s32.totalorder %s21, 1
    %p44 = por %p42, %p43
    %p46 = scmp.ne.s32.totalorder %s29, %s45
    %p47 = scmp.eq.s32.totalorder %s21, 0
    %p48 = por %p46, %p47
    %s50 = sadd.s32 %s49, 1
    %p53 = scmp.eq.s32.totalorder %s15, 1
    %p54 = scmp.ne.s32.totalorder %s49, %s51
    %p55 = scmp.eq.s32.totalorder %s15, 0
    %p56 = por %p54, %p55
    %p57 = scmp.ne.s32.totalorder %s49, %s51
    %p58 = scmp.eq.s32.totalorder %s20, 1
    %p59 = por %p57, %p58
    %p60 = scmp.ne.s32.totalorder %s51, %s52
    %p61 = scmp.eq.s32.totalorder %s20, 0
    %p62 = por %p60, %p61
    %p63 = scmp.ne.s32.totalorder %s51, %s52
    %p64 = scmp.eq.s32.totalorder %s21, 1
    %p65 = por %p63, %p64
    %p67 = scmp.ne.s32.totalorder %s52, %s66
    %p68 = scmp.eq.s32.totalorder %s21, 0
    %p69 = por %p67, %p68
    %s71 = sadd.s32 %s70, 1
    %p74 = scmp.eq.s32.totalorder %s15, 1
    %p75 = scmp.ne.s32.totalorder %s70, %s72
    %p76 = scmp.eq.s32.totalorder %s15, 0
    %p77 = por %p75, %p76
    %p78 = scmp.ne.s32.totalorder %s70, %s72
    %p79 = scmp.eq.s32.totalorder %s20, 1
    %p80 = por %p78, %p79
    %p81 = scmp.ne.s32.totalorder %s72, %s73
    %p82 = scmp.eq.s32.totalorder %s20, 0
    %p83 = por %p81, %p82
    %p84 = scmp.ne.s32.totalorder %s72, %s73
    %p85 = scmp.eq.s32.totalorder %s21, 1
    %p86 = por %p84, %p85
    %p88 = scmp.ne.s32.totalorder %s73, %s87
    %p89 = scmp.eq.s32.totalorder %s21, 0
    %p90 = por %p88, %p89
    %s92 = sadd.s32 %s91, 1
    %p95 = scmp.eq.s32.totalorder %s15, 1
    %p96 = scmp.ne.s32.totalorder %s91, %s93
    %p97 = scmp.eq.s32.totalorder %s15, 0
    %p98 = por %p96, %p97
    %p99 = scmp.ne.s32.totalorder %s91, %s93
    %p100 = scmp.eq.s32.totalorder %s20, 1
    %p101 = por %p99, %p100
    %p102 = scmp.ne.s32.totalorder %s93, %s94
    %p103 = scmp.eq.s32.totalorder %s20, 0
    %p104 = por %p102, %p103
    %p105 = scmp.ne.s32.totalorder %s93, %s94
    %p106 = scmp.eq.s32.totalorder %s21, 1
    %p107 = por %p105, %p106
    %p109 = scmp.ne.s32.totalorder %s94, %s108
    %p110 = scmp.eq.s32.totalorder %s21, 0
    %p111 = por %p109, %p110
    %s113 = sadd.s32 %s112, 1
    %p116 = scmp.eq.s32.totalorder %s15, 1
    %p117 = scmp.ne.s32.totalorder %s112, %s114
    %p118 = scmp.eq.s32.totalorder %s15, 0
    %p119 = por %p117, %p118
    %p120 = scmp.ne.s32.totalorder %s112, %s114
    %p121 = scmp.eq.s32.totalorder %s20, 1
    %p122 = por %p120, %p121
    %p123 = scmp.ne.s32.totalorder %s114, %s115
    %p124 = scmp.eq.s32.totalorder %s20, 0
    %p125 = por %p123, %p124
    %p126 = scmp.ne.s32.totalorder %s114, %s115
    %p127 = scmp.eq.s32.totalorder %s21, 1
    %p128 = por %p126, %p127
    %p130 = scmp.ne.s32.totalorder %s115, %s129
    %p131 = scmp.eq.s32.totalorder %s21, 0
    %p132 = por %p130, %p131
    %s134 = sadd.s32 %s133, 1
    %p137 = scmp.eq.s32.totalorder %s15, 1
    %p138 = scmp.ne.s32.totalorder %s133, %s135
    %p139 = scmp.eq.s32.totalorder %s15, 0
    %p140 = por %p138, %p139
    %p141 = scmp.ne.s32.totalorder %s133, %s135
    %p142 = scmp.eq.s32.totalorder %s20, 1
    %p143 = por %p141, %p142
    %p144 = scmp.ne.s32.totalorder %s135, %s136
    %p145 = scmp.eq.s32.totalorder %s20, 0
    %p146 = por %p144, %p145
    %p147 = scmp.ne.s32.totalorder %s135, %s136
    %p148 = scmp.eq.s32.totalorder %s21, 1
    %p149 = por %p147, %p148
    %p151 = scmp.ne.s32.totalorder %s136, %s150
    %p152 = scmp.eq.s32.totalorder %s21, 0
    %p153 = por %p151, %p152
    %s155 = sadd.s32 %s154, 1
    %p158 = scmp.eq.s32.totalorder %s15, 1
    %p159 = scmp.ne.s32.totalorder %s154, %s156
    %p160 = scmp.eq.s32.totalorder %s15, 0
    %p161 = por %p159, %p160
    %p162 = scmp.ne.s32.totalorder %s154, %s156
    %p163 = scmp.eq.s32.totalorder %s20, 1
    %p164 = por %p162, %p163
    %p165 = scmp.ne.s32.totalorder %s156, %s157
    %p166 = scmp.eq.s32.totalorder %s20, 0
    %p167 = por %p165, %p166
    %p168 = scmp.ne.s32.totalorder %s156, %s157
    %p169 = scmp.eq.s32.totalorder %s21, 1
    %p170 = por %p168, %p169
    %p172 = scmp.ne.s32.totalorder %s157, %s171
    %p173 = scmp.eq.s32.totalorder %s21, 0
    %p174 = por %p172, %p173
    %s176 = sadd.s32 %s175, 1
    %p179 = scmp.eq.s32.totalorder %s15, 1
    %p180 = scmp.ne.s32.totalorder %s175, %s177
    %p181 = scmp.eq.s32.totalorder %s15, 0
    %p182 = por %p180, %p181
    %p183 = scmp.ne.s32.totalorder %s175, %s177
    %p184 = scmp.eq.s32.totalorder %s20, 1
    %p185 = por %p183, %p184
    %p186 = scmp.ne.s32.totalorder %s177, %s178
    %p187 = scmp.eq.s32.totalorder %s20, 0
    %p188 = por %p186, %p187
    %p189 = scmp.ne.s32.totalorder %s177, %s178
    %p190 = scmp.eq.s32.totalorder %s21, 1
    %p191 = por %p189, %p190
    %p193 = scmp.ne.s32.totalorder %s178, %s192
    %p194 = scmp.eq.s32.totalorder %s21, 0
    %p195 = por %p193, %p194
    %s197 = sadd.s32 %s196, 1
    %p200 = scmp.eq.s32.totalorder %s15, 1
    %p201 = scmp.ne.s32.totalorder %s196, %s198
    %p202 = scmp.eq.s32.totalorder %s15, 0
    %p203 = por %p201, %p202
    %p204 = scmp.ne.s32.totalorder %s196, %s198
    %p205 = scmp.eq.s32.totalorder %s20, 1
    %p206 = por %p204, %p205
    %p207 = scmp.ne.s32.totalorder %s198, %s199
    %p208 = scmp.eq.s32.totalorder %s20, 0
    %p209 = por %p207, %p208
    %p210 = scmp.ne.s32.totalorder %s198, %s199
    %p211 = scmp.eq.s32.totalorder %s21, 1
    %p212 = por %p210, %p211
    %p214 = scmp.ne.s32.totalorder %s199, %s213
    %p215 = scmp.eq.s32.totalorder %s21, 0
    %p216 = por %p214, %p215
    %s217 = ssub.s32 %s15, %s22
    %p218 = scmp.eq.s32.totalorder %s217, 0
    %s220 = sadd.s32 %s219, 1
    %s221 = scalar_select %p218, %s219, %s220
    %p224 = pneg %p218
    %p225 = scmp.eq.s32.totalorder %s15, 1
    %p226 = por %p224, %p225
    %p227 = scmp.ne.s32.totalorder %s219, %s222
    %p228 = scmp.eq.s32.totalorder %s15, 0
    %p229 = por %p227, %p228
    %p230 = scmp.ne.s32.totalorder %s219, %s222
    %p231 = scmp.eq.s32.totalorder %s20, 1
    %p232 = por %p230, %p231
    %p233 = scmp.ne.s32.totalorder %s222, %s223
    %p234 = scmp.eq.s32.totalorder %s20, 0
    %p235 = por %p233, %p234
    %p236 = scmp.ne.s32.totalorder %s222, %s223
    %p237 = scmp.eq.s32.totalorder %s21, 1
    %p238 = por %p236, %p237
    %p240 = scmp.ne.s32.totalorder %s223, %s239
    %p241 = scmp.eq.s32.totalorder %s21, 0
    %p242 = por %p240, %p241
    %p243 = scmp.le.s32.totalorder 1, %s15
    %p244 = scmp.lt.s32.totalorder %s15, 3
    %p245 = pnand %p243, %p244
    %p246 = pneg %p245
    // Predicated region
    $region9: #{_fwfnn_forward_impl.1} parent=5 // pred_check
      _
    $region10: #{_fwfnn_forward_impl.1} parent=5 // pred_check_branch
      %248 = sbr.rel (%p245) target = $region12
    $region11: #{_fwfnn_forward_impl.1} parent=5 // pred_region
      %s249 = ssub.s32 %s15, 1
      // Predicated region
      $region13: #{_fwfnn_forward_impl.1} parent=11 // pred_check
        %p250 = pneg %p62
      $region14: #{_fwfnn_forward_impl.1} parent=11 // pred_check_branch
        %252 = sbr.rel (%p250) target = $region16
      $region15: #{_fwfnn_forward_impl.1} parent=11 // pred_region
        _
      $region16: #{_fwfnn_forward_impl.1} parent=11 // pred_fallthru
        _
      // Predicated region
      $region17: #{_fwfnn_forward_impl.1} parent=11 // pred_check
        %p253 = pneg %p83
      $region18: #{_fwfnn_forward_impl.1} parent=11 // pred_check_branch
        %255 = sbr.rel (%p253) target = $region20
      $region19: #{_fwfnn_forward_impl.1} parent=11 // pred_region
        _
      $region20: #{_fwfnn_forward_impl.1} parent=11 // pred_fallthru
        _
      // Predicated region
      $region21: #{_fwfnn_forward_impl.1} parent=11 // pred_check
        %p256 = pneg %p104
      $region22: #{_fwfnn_forward_impl.1} parent=11 // pred_check_branch
        %258 = sbr.rel (%p256) target = $region24
      $region23: #{_fwfnn_forward_impl.1} parent=11 // pred_region
        _
      $region24: #{_fwfnn_forward_impl.1} parent=11 // pred_fallthru
        _
      // Predicated region
      $region25: #{_fwfnn_forward_impl.1} parent=11 // pred_check
        %p259 = pneg %p125
      $region26: #{_fwfnn_forward_impl.1} parent=11 // pred_check_branch
        %261 = sbr.rel (%p259) target = $region28
      $region27: #{_fwfnn_forward_impl.1} parent=11 // pred_region
        _
      $region28: #{_fwfnn_forward_impl.1} parent=11 // pred_fallthru
        _
      // Predicated region
      $region29: #{_fwfnn_forward_impl.1} parent=11 // pred_check
        %p262 = pneg %p146
      $region30: #{_fwfnn_forward_impl.1} parent=11 // pred_check_branch
        %264 = sbr.rel (%p262) target = $region32
      $region31: #{_fwfnn_forward_impl.1} parent=11 // pred_region
        _
      $region32: #{_fwfnn_forward_impl.1} parent=11 // pred_fallthru
        _
      // Predicated region
      $region33: #{_fwfnn_forward_impl.1} parent=11 // pred_check
        %p265 = pneg %p167
      $region34: #{_fwfnn_forward_impl.1} parent=11 // pred_check_branch
        %267 = sbr.rel (%p265) target = $region36
      $region35: #{_fwfnn_forward_impl.1} parent=11 // pred_region
        _
      $region36: #{_fwfnn_forward_impl.1} parent=11 // pred_fallthru
        _
      // Predicated region
      $region37: #{_fwfnn_forward_impl.1} parent=11 // pred_check
        %p268 = pneg %p188
      $region38: #{_fwfnn_forward_impl.1} parent=11 // pred_check_branch
        %270 = sbr.rel (%p268) target = $region40
      $region39: #{_fwfnn_forward_impl.1} parent=11 // pred_region
        _
      $region40: #{_fwfnn_forward_impl.1} parent=11 // pred_fallthru
        _
      // Predicated region
      $region41: #{_fwfnn_forward_impl.1} parent=11 // pred_check
        %p271 = pneg %p209
      $region42: #{_fwfnn_forward_impl.1} parent=11 // pred_check_branch
        %273 = sbr.rel (%p271) target = $region44
      $region43: #{_fwfnn_forward_impl.1} parent=11 // pred_region
        _
      $region44: #{_fwfnn_forward_impl.1} parent=11 // pred_fallthru
        _
    $region12: #{_fwfnn_forward_impl.1} parent=5 // pred_fallthru
      _
    %p274 = scmp.lt.s32.totalorder %s15, 2
    // Predicated region
    $region45: #{_fwfnn_forward_impl.1} parent=5 // pred_check
      %p275 = pneg %p274
    $region46: #{_fwfnn_forward_impl.1} parent=5 // pred_check_branch
      %277 = sbr.rel (%p275) target = $region48
    $region47: #{_fwfnn_forward_impl.1} parent=5 // pred_region
      // Predicated region
      $region49: #{_fwfnn_forward_impl.1} parent=47 // pred_check
        %p278 = pneg %p35
      $region50: #{_fwfnn_forward_impl.1} parent=47 // pred_check_branch
        %280 = sbr.rel (%p278) target = $region52
      $region51: #{_fwfnn_forward_impl.1} parent=47 // pred_region
        %s281 = smul.u32 4, %s15
        %p282 = scmp.lt.s32.totalorder %s281, 7
        %s283 = scalar_select %p282, %s281, 7
        %s284 = smul.addr %s283, 8
        %s285 = scalar_lea.vmem %s0, %s284
        %s286 = smul.u32 4, %s15
      $region52: #{_fwfnn_forward_impl.1} parent=47 // pred_fallthru
        _
    $region48: #{_fwfnn_forward_impl.1} parent=5 // pred_fallthru
      _
    %p287 = scmp.le.s32.totalorder 1, %s15
    %p288 = scmp.lt.s32.totalorder %s15, 3
    %p289 = pnand %p287, %p288
    %p290 = pneg %p289
    // Predicated region
    $region53: #{_fwfnn_forward_impl.1} parent=5 // pred_check
      _
    $region54: #{_fwfnn_forward_impl.1} parent=5 // pred_check_branch
      %292 = sbr.rel (%p289) target = $region56
    $region55: #{_fwfnn_forward_impl.1} parent=5 // pred_region
      %s293 = ssub.s32 %s15, 1
      %s294 = smul.u32 4, %s20
      %p295 = scmp.lt.s32.totalorder %s294, 7
      %s296 = scalar_select %p295, %s294, 7
      %s297 = smul.addr %s296, 8
      %s298 = scalar_lea.vmem %s0, %s297
      %p299 = pneg %p41
      %p300 = pneg %p38
      %p301 = pneg %p62
      %p302 = pneg %p59
      %p303 = pneg %p83
      %p304 = pneg %p80
      %p305 = pneg %p104
      %p306 = pneg %p101
      %p307 = pneg %p125
      %p308 = pneg %p122
      %p309 = pneg %p146
      %p310 = pneg %p143
      %p311 = pneg %p167
      %p312 = pneg %p164
      %p313 = pneg %p188
      %p314 = pneg %p185
      %p315 = pneg %p209
      %p316 = pneg %p206
      %p317 = pneg %p235
      %p318 = pneg %p232
      %s319 = smul.u32 4, %s20
      %p320 = scmp.lt.s32.totalorder %s319, 7
      %s321 = scalar_select %p320, %s319, 7
      %s322 = smul.addr %s321, 8
      %s323 = scalar_lea.vmem %s9, %s322
      %s324 = smul.u32 4, %s20
      %p325 = scmp.lt.s32.totalorder %s324, 7
      %s326 = scalar_select %p325, %s324, 7
      %s327 = smul.addr %s326, 8
      %s328 = scalar_lea.vmem %s0, %s327
      %s329 = smul.u32 4, %s20
      %s330 = smul.u32 4, %s20
      %p331 = scmp.lt.s32.totalorder %s330, 7
      %s332 = scalar_select %p331, %s330, 7
      %s333 = smul.addr %s332, 8
      %s334 = scalar_lea.vmem %s9, %s333
      %s335 = smul.u32 4, %s20
      %v337 = vld [vmem:[%s328] sm:$0xff]
      %v338 = vld [vmem:[%s328 + $0x8] sm:$0xff]
      %v339 = vld [vmem:[%s328 + $0x10] sm:$0xff]
      %v340 = vld [vmem:[%s328 + $0x18] sm:$0xff]
      %v341 = vpack.c.bf16 %v338, %v337
      %v342 = vpack.c.bf16 %v340, %v339
      %v343 = vld [vmem:[%s1] sm:$0xf]
      %v344 = vld [vmem:[%s1 + $0x4] sm:$0xf]
      %v345 = vld [vmem:[%s2] sm:$0x1]
      %v347 = vlaneseq
      %v348 = vshrl.u32 %v347, 7
      %v349 = vsub.s32 0, %v348
      %v350 = vrot.slane %v345, %v349
      %v354 = vunpack.c.l.b16 %v343
      %v355 = vunpack.c.l.b16 %v344
      %v356 = vpack.c.b16 %v355, %v354
      %vm358 = vcmask 130048
      %v360 = vsel %vm358, %v341, 0
      %v363 = vsel %vm358, %v342, 0
      %365 = vmatprep.subr.bf16.mxu0 0
      %366 = vmatpush1.bf16.msra.mxu0 %v356
      %367 = vmatprep.subr.bf16.mxu0 0
      %368 = vmatpush1.bf16.msra.mxu0 0
      %369 = vmatprep.subr.bf16.mxu0 0
      %370 = vmatpush1.bf16.msra.mxu0 0
      %371 = vmatprep.subr.bf16.mxu0 0
      %372 = vmatpush1.bf16.msra.mxu0 0
      %373 = vmatprep.subr.bf16.mxu0 0
      %374 = vmatpush1.bf16.msra.mxu0 0
      %375 = vmatprep.subr.bf16.mxu0 0
      %376 = vmatpush1.bf16.msra.mxu0 0
      %377 = vmatprep.subr.bf16.mxu0 0
      %378 = vmatpush1.bf16.msra.mxu0 0
      %379 = vmatprep.subr.bf16.mxu0 0
      %380 = vmatpush1.bf16.msra.mxu0 0
      %381 = vmatprep.subr.bf16.mxu0 0
      %382 = vmatpush1.bf16.msra.mxu0 0
      %383 = vmatprep.subr.bf16.mxu0 0
      %384 = vmatpush1.bf16.msra.mxu0 0
      %385 = vmatprep.subr.bf16.mxu0 0
      %386 = vmatpush1.bf16.msra.mxu0 0
      %387 = vmatprep.subr.bf16.mxu0 0
      %388 = vmatpush1.bf16.msra.mxu0 0
      %389 = vmatprep.subr.bf16.mxu0 0
      %390 = vmatpush1.bf16.msra.mxu0 0
      %391 = vmatprep.subr.bf16.mxu0 0
      %392 = vmatpush1.bf16.msra.mxu0 0
      %393 = vmatprep.subr.bf16.mxu0 0
      %394 = vmatpush1.bf16.msra.mxu0 0
      %395 = vmatprep.subr.bf16.mxu0 0
      %396 = vmatpush1.bf16.msra.mxu0 0
      %397 = vmatprep.mubr.bf16.mxu0 0
      %398 = vmatmul.mubr.bf16.gmra.mrb[0].mxu0 %v360
      %v399 = vpop.f32.mrb[0].mxu0
      %v400 = vadd.f32 %v350, %v399
      %v401 = vpop.f32.mrb[0].mxu0
      %v402 = vpop.f32.mrb[0].mxu0
      %v403 = vadd.f32 %v350, %v402
      %v404 = vpop.f32.mrb[0].mxu0
      %405 = vmatprep.mubr.bf16.mxu0 0
      %406 = vmatmul.mubr.bf16.gmra.mrb[0].mxu0 %v363
      %v407 = vpop.f32.mrb[0].mxu0
      %v408 = vadd.f32 %v350, %v407
      %v409 = vpop.f32.mrb[0].mxu0
      %v410 = vpop.f32.mrb[0].mxu0
      %v411 = vadd.f32 %v350, %v410
      %v412 = vpop.f32.mrb[0].mxu0
      %413 = vdwg.mxu0
      %v414 = vmax.f32 %v400, 0.0
      %v415 = vmax.f32 %v403, 0.0
      %v416 = vmax.f32 %v408, 0.0
      %v417 = vmax.f32 %v411, 0.0
      %v418 = vpack.c.bf16 %v415, %v414
      %v419 = vpack.c.bf16 %v417, %v416
      %v420 = vld [vmem:[%s3] sm:$0xf]
      %v421 = vld [vmem:[%s3 + $0x4] sm:$0xf]
      %v422 = vld [vmem:[%s3 + $0x8] sm:$0xf]
      %v423 = vld [vmem:[%s3 + $0xc] sm:$0xf]
      %v424 = vld [vmem:[%s3 + $0x10] sm:$0xf]
      %v425 = vld [vmem:[%s3 + $0x14] sm:$0xf]
      %v426 = vld [vmem:[%s3 + $0x18] sm:$0xf]
      %v427 = vld [vmem:[%s3 + $0x1c] sm:$0xf]
      %v428 = vld [vmem:[%s3 + $0x20] sm:$0xf]
      %v429 = vld [vmem:[%s3 + $0x24] sm:$0xf]
      %v430 = vld [vmem:[%s3 + $0x28] sm:$0xf]
      %v431 = vld [vmem:[%s3 + $0x2c] sm:$0xf]
      %v432 = vld [vmem:[%s3 + $0x30] sm:$0xf]
      %v433 = vld [vmem:[%s3 + $0x34] sm:$0xf]
      %v434 = vld [vmem:[%s3 + $0x38] sm:$0xf]
      %v435 = vld [vmem:[%s3 + $0x3c] sm:$0xf]
      %v436 = vld [vmem:[%s4] sm:$0x1]
      %v438 = vlaneseq
      %v439 = vshrl.u32 %v438, 7
      %v440 = vsub.s32 0, %v439
      %v441 = vrot.slane %v436, %v440
      %v459 = vunpack.c.l.b16 %v420
      %v460 = vunpack.c.l.b16 %v421
      %v461 = vunpack.c.l.b16 %v422
      %v462 = vunpack.c.l.b16 %v423
      %v463 = vunpack.c.l.b16 %v424
      %v464 = vunpack.c.l.b16 %v425
      %v465 = vunpack.c.l.b16 %v426
      %v466 = vunpack.c.l.b16 %v427
      %v467 = vunpack.c.l.b16 %v428
      %v468 = vunpack.c.l.b16 %v429
      %v469 = vunpack.c.l.b16 %v430
      %v470 = vunpack.c.l.b16 %v431
      %v471 = vunpack.c.l.b16 %v432
      %v472 = vunpack.c.l.b16 %v433
      %v473 = vunpack.c.l.b16 %v434
      %v474 = vunpack.c.l.b16 %v435
      %v475 = vpack.c.b16 %v460, %v459
      %v476 = vpack.c.b16 %v462, %v461
      %v477 = vpack.c.b16 %v464, %v463
      %v478 = vpack.c.b16 %v466, %v465
      %v479 = vpack.c.b16 %v468, %v467
      %v480 = vpack.c.b16 %v470, %v469
      %v481 = vpack.c.b16 %v472, %v471
      %v482 = vpack.c.b16 %v474, %v473
      %491 = vmatprep.subr.bf16.mxu0 0
      %492 = vmatpush1.bf16.msra.mxu0 %v475
      %493 = vmatprep.subr.bf16.mxu0 0
      %494 = vmatpush1.bf16.msra.mxu0 %v476
      %495 = vmatprep.subr.bf16.mxu0 0
      %496 = vmatpush1.bf16.msra.mxu0 %v477
      %497 = vmatprep.subr.bf16.mxu0 0
      %498 = vmatpush1.bf16.msra.mxu0 %v478
      %499 = vmatprep.subr.bf16.mxu0 0
      %500 = vmatpush1.bf16.msra.mxu0 %v479
      %501 = vmatprep.subr.bf16.mxu0 0
      %502 = vmatpush1.bf16.msra.mxu0 %v480
      %503 = vmatprep.subr.bf16.mxu0 0
      %504 = vmatpush1.bf16.msra.mxu0 %v481
      %505 = vmatprep.subr.bf16.mxu0 0
      %506 = vmatpush1.bf16.msra.mxu0 %v482
      %507 = vmatprep.subr.bf16.mxu0 0
      %508 = vmatpush1.bf16.msra.mxu0 0
      %509 = vmatprep.subr.bf16.mxu0 0
      %510 = vmatpush1.bf16.msra.mxu0 0
      %511 = vmatprep.subr.bf16.mxu0 0
      %512 = vmatpush1.bf16.msra.mxu0 0
      %513 = vmatprep.subr.bf16.mxu0 0
      %514 = vmatpush1.bf16.msra.mxu0 0
      %515 = vmatprep.subr.bf16.mxu0 0
      %516 = vmatpush1.bf16.msra.mxu0 0
      %517 = vmatprep.subr.bf16.mxu0 0
      %518 = vmatpush1.bf16.msra.mxu0 0
      %519 = vmatprep.subr.bf16.mxu0 0
      %520 = vmatpush1.bf16.msra.mxu0 0
      %521 = vmatprep.subr.bf16.mxu0 0
      %522 = vmatpush1.bf16.msra.mxu0 0
      %523 = vmatprep.mubr.bf16.mxu0 0
      %524 = vmatmul.mubr.bf16.gmra.mrb[0].mxu0 %v418
      %v525 = vpop.f32.mrb[0].mxu0
      %v526 = vadd.f32 %v441, %v525
      %v527 = vpop.f32.mrb[0].mxu0
      %v528 = vpop.f32.mrb[0].mxu0
      %v529 = vadd.f32 %v441, %v528
      %v530 = vpop.f32.mrb[0].mxu0
      %531 = vmatprep.mubr.bf16.mxu0 0
      %532 = vmatmul.mubr.bf16.gmra.mrb[0].mxu0 %v419
      %v533 = vpop.f32.mrb[0].mxu0
      %v534 = vadd.f32 %v441, %v533
      %v535 = vpop.f32.mrb[0].mxu0
      %v536 = vpop.f32.mrb[0].mxu0
      %v537 = vadd.f32 %v441, %v536
      %v538 = vpop.f32.mrb[0].mxu0
      %539 = vdwg.mxu0
      %v540 = vmax.f32 %v526, 0.0
      %v541 = vmax.f32 %v529, 0.0
      %v542 = vmax.f32 %v534, 0.0
      %v543 = vmax.f32 %v537, 0.0
      %v544 = vpack.c.bf16 %v541, %v540
      %v545 = vpack.c.bf16 %v543, %v542
      %v546 = vld [vmem:[%s5] sm:$0xf]
      %v547 = vld [vmem:[%s5 + $0x4] sm:$0xf]
      %v548 = vld [vmem:[%s5 + $0x8] sm:$0xf]
      %v549 = vld [vmem:[%s5 + $0xc] sm:$0xf]
      %v550 = vld [vmem:[%s5 + $0x10] sm:$0xf]
      %v551 = vld [vmem:[%s5 + $0x14] sm:$0xf]
      %v552 = vld [vmem:[%s5 + $0x18] sm:$0xf]
      %v553 = vld [vmem:[%s5 + $0x1c] sm:$0xf]
      %v554 = vld [vmem:[%s5 + $0x20] sm:$0xf]
      %v555 = vld [vmem:[%s5 + $0x24] sm:$0xf]
      %v556 = vld [vmem:[%s5 + $0x28] sm:$0xf]
      %v557 = vld [vmem:[%s5 + $0x2c] sm:$0xf]
      %v558 = vld [vmem:[%s5 + $0x30] sm:$0xf]
      %v559 = vld [vmem:[%s5 + $0x34] sm:$0xf]
      %v560 = vld [vmem:[%s5 + $0x38] sm:$0xf]
      %v561 = vld [vmem:[%s5 + $0x3c] sm:$0xf]
      %v562 = vld [vmem:[%s6] sm:$0x1]
      %v564 = vlaneseq
      %v565 = vshrl.u32 %v564, 7
      %v566 = vsub.s32 0, %v565
      %v567 = vrot.slane %v562, %v566
      %v585 = vunpack.c.l.b16 %v546
      %v586 = vunpack.c.l.b16 %v547
      %v587 = vunpack.c.l.b16 %v548
      %v588 = vunpack.c.l.b16 %v549
      %v589 = vunpack.c.l.b16 %v550
      %v590 = vunpack.c.l.b16 %v551
      %v591 = vunpack.c.l.b16 %v552
      %v592 = vunpack.c.l.b16 %v553
      %v593 = vunpack.c.l.b16 %v554
      %v594 = vunpack.c.l.b16 %v555
      %v595 = vunpack.c.l.b16 %v556
      %v596 = vunpack.c.l.b16 %v557
      %v597 = vunpack.c.l.b16 %v558
      %v598 = vunpack.c.l.b16 %v559
      %v599 = vunpack.c.l.b16 %v560
      %v600 = vunpack.c.l.b16 %v561
      %v601 = vpack.c.b16 %v586, %v585
      %v602 = vpack.c.b16 %v588, %v587
      %v603 = vpack.c.b16 %v590, %v589
      %v604 = vpack.c.b16 %v592, %v591
      %v605 = vpack.c.b16 %v594, %v593
      %v606 = vpack.c.b16 %v596, %v595
      %v607 = vpack.c.b16 %v598, %v597
      %v608 = vpack.c.b16 %v600, %v599
      %617 = vmatprep.subr.bf16.mxu0 0
      %618 = vmatpush1.bf16.msra.mxu0 %v601
      %619 = vmatprep.subr.bf16.mxu0 0
      %620 = vmatpush1.bf16.msra.mxu0 %v602
      %621 = vmatprep.subr.bf16.mxu0 0
      %622 = vmatpush1.bf16.msra.mxu0 %v603
      %623 = vmatprep.subr.bf16.mxu0 0
      %624 = vmatpush1.bf16.msra.mxu0 %v604
      %625 = vmatprep.subr.bf16.mxu0 0
      %626 = vmatpush1.bf16.msra.mxu0 %v605
      %627 = vmatprep.subr.bf16.mxu0 0
      %628 = vmatpush1.bf16.msra.mxu0 %v606
      %629 = vmatprep.subr.bf16.mxu0 0
      %630 = vmatpush1.bf16.msra.mxu0 %v607
      %631 = vmatprep.subr.bf16.mxu0 0
      %632 = vmatpush1.bf16.msra.mxu0 %v608
      %633 = vmatprep.subr.bf16.mxu0 0
      %634 = vmatpush1.bf16.msra.mxu0 0
      %635 = vmatprep.subr.bf16.mxu0 0
      %636 = vmatpush1.bf16.msra.mxu0 0
      %637 = vmatprep.subr.bf16.mxu0 0
      %638 = vmatpush1.bf16.msra.mxu0 0
      %639 = vmatprep.subr.bf16.mxu0 0
      %640 = vmatpush1.bf16.msra.mxu0 0
      %641 = vmatprep.subr.bf16.mxu0 0
      %642 = vmatpush1.bf16.msra.mxu0 0
      %643 = vmatprep.subr.bf16.mxu0 0
      %644 = vmatpush1.bf16.msra.mxu0 0
      %645 = vmatprep.subr.bf16.mxu0 0
      %646 = vmatpush1.bf16.msra.mxu0 0
      %647 = vmatprep.subr.bf16.mxu0 0
      %648 = vmatpush1.bf16.msra.mxu0 0
      %649 = vmatprep.mubr.bf16.mxu0 0
      %650 = vmatmul.mubr.bf16.gmra.mrb[0].mxu0 %v544
      %v651 = vpop.f32.mrb[0].mxu0
      %v652 = vadd.f32 %v567, %v651
      %v653 = vpop.f32.mrb[0].mxu0
      %v654 = vpop.f32.mrb[0].mxu0
      %v655 = vadd.f32 %v567, %v654
      %v656 = vpop.f32.mrb[0].mxu0
      %657 = vmatprep.mubr.bf16.mxu0 0
      %658 = vmatmul.mubr.bf16.gmra.mrb[0].mxu0 %v545
      %v659 = vpop.f32.mrb[0].mxu0
      %v660 = vadd.f32 %v567, %v659
      %v661 = vpop.f32.mrb[0].mxu0
      %v662 = vpop.f32.mrb[0].mxu0
      %v663 = vadd.f32 %v567, %v662
      %v664 = vpop.f32.mrb[0].mxu0
      %665 = vdwg.mxu0
      %v666 = vmax.f32 %v652, 0.0
      %v667 = vmax.f32 %v655, 0.0
      %v668 = vmax.f32 %v660, 0.0
      %v669 = vmax.f32 %v663, 0.0
      %v670 = vpack.c.bf16 %v667, %v666
      %v671 = vpack.c.bf16 %v669, %v668
      %v672 = vld [vmem:[%s7] sm:$0xf]
      %v673 = vld [vmem:[%s7 + $0x4] sm:$0xf]
      %v674 = vld [vmem:[%s7 + $0x8] sm:$0xf]
      %v675 = vld [vmem:[%s7 + $0xc] sm:$0xf]
      %v676 = vld [vmem:[%s7 + $0x10] sm:$0xf]
      %v677 = vld [vmem:[%s7 + $0x14] sm:$0xf]
      %v678 = vld [vmem:[%s7 + $0x18] sm:$0xf]
      %v679 = vld [vmem:[%s7 + $0x1c] sm:$0xf]
      %v680 = vld [vmem:[%s7 + $0x20] sm:$0xf]
      %v681 = vld [vmem:[%s7 + $0x24] sm:$0xf]
      %v682 = vld [vmem:[%s7 + $0x28] sm:$0xf]
      %v683 = vld [vmem:[%s7 + $0x2c] sm:$0xf]
      %v684 = vld [vmem:[%s7 + $0x30] sm:$0xf]
      %v685 = vld [vmem:[%s7 + $0x34] sm:$0xf]
      %v686 = vld [vmem:[%s7 + $0x38] sm:$0xf]
      %v687 = vld [vmem:[%s7 + $0x3c] sm:$0xf]
      %v688 = vld [vmem:[%s8] sm:$0x1]
      %v690 = vlaneseq
      %v691 = vshrl.u32 %v690, 7
      %v692 = vsub.s32 0, %v691
      %v693 = vrot.slane %v688, %v692
      %v711 = vunpack.c.l.b16 %v672
      %v712 = vunpack.c.l.b16 %v673
      %v713 = vunpack.c.l.b16 %v674
      %v714 = vunpack.c.l.b16 %v675
      %v715 = vunpack.c.l.b16 %v676
      %v716 = vunpack.c.l.b16 %v677
      %v717 = vunpack.c.l.b16 %v678
      %v718 = vunpack.c.l.b16 %v679
      %v719 = vunpack.c.l.b16 %v680
      %v720 = vunpack.c.l.b16 %v681
      %v721 = vunpack.c.l.b16 %v682
      %v722 = vunpack.c.l.b16 %v683
      %v723 = vunpack.c.l.b16 %v684
      %v724 = vunpack.c.l.b16 %v685
      %v725 = vunpack.c.l.b16 %v686
      %v726 = vunpack.c.l.b16 %v687
      %v727 = vpack.c.b16 %v712, %v711
      %v728 = vpack.c.b16 %v714, %v713
      %v729 = vpack.c.b16 %v716, %v715
      %v730 = vpack.c.b16 %v718, %v717
      %v731 = vpack.c.b16 %v720, %v719
      %v732 = vpack.c.b16 %v722, %v721
      %v733 = vpack.c.b16 %v724, %v723
      %v734 = vpack.c.b16 %v726, %v725
      %743 = vmatprep.subr.bf16.mxu0 0
      %744 = vmatpush1.bf16.msra.mxu0 %v727
      %745 = vmatprep.subr.bf16.mxu0 0
      %746 = vmatpush1.bf16.msra.mxu0 %v728
      %747 = vmatprep.subr.bf16.mxu0 0
      %748 = vmatpush1.bf16.msra.mxu0 %v729
      %749 = vmatprep.subr.bf16.mxu0 0
      %750 = vmatpush1.bf16.msra.mxu0 %v730
      %751 = vmatprep.subr.bf16.mxu0 0
      %752 = vmatpush1.bf16.msra.mxu0 %v731
      %753 = vmatprep.subr.bf16.mxu0 0
      %754 = vmatpush1.bf16.msra.mxu0 %v732
      %755 = vmatprep.subr.bf16.mxu0 0
      %756 = vmatpush1.bf16.msra.mxu0 %v733
      %757 = vmatprep.subr.bf16.mxu0 0
      %758 = vmatpush1.bf16.msra.mxu0 %v734
      %759 = vmatprep.subr.bf16.mxu0 0
      %760 = vmatpush1.bf16.msra.mxu0 0
      %761 = vmatprep.subr.bf16.mxu0 0
      %762 = vmatpush1.bf16.msra.mxu0 0
      %763 = vmatprep.subr.bf16.mxu0 0
      %764 = vmatpush1.bf16.msra.mxu0 0
      %765 = vmatprep.subr.bf16.mxu0 0
      %766 = vmatpush1.bf16.msra.mxu0 0
      %767 = vmatprep.subr.bf16.mxu0 0
      %768 = vmatpush1.bf16.msra.mxu0 0
      %769 = vmatprep.subr.bf16.mxu0 0
      %770 = vmatpush1.bf16.msra.mxu0 0
      %771 = vmatprep.subr.bf16.mxu0 0
      %772 = vmatpush1.bf16.msra.mxu0 0
      %773 = vmatprep.subr.bf16.mxu0 0
      %774 = vmatpush1.bf16.msra.mxu0 0
      %775 = vmatprep.mubr.bf16.mxu0 0
      %776 = vmatmul.mubr.bf16.gmra.mrb[0].mxu0 %v670
      %v777 = vpop.f32.mrb[0].mxu0
      %v778 = vadd.f32 %v693, %v777
      %v779 = vpop.f32.mrb[0].mxu0
      %v780 = vpop.f32.mrb[0].mxu0
      %v781 = vadd.f32 %v693, %v780
      %v782 = vpop.f32.mrb[0].mxu0
      %783 = vmatprep.mubr.bf16.mxu0 0
      %784 = vmatmul.mubr.bf16.gmra.mrb[0].mxu0 %v671
      %v785 = vpop.f32.mrb[0].mxu0
      %v786 = vadd.f32 %v693, %v785
      %v787 = vpop.f32.mrb[0].mxu0
      %v788 = vpop.f32.mrb[0].mxu0
      %v789 = vadd.f32 %v693, %v788
      %v790 = vpop.f32.mrb[0].mxu0
      %791 = vdwg.mxu0
      %792 = vst [vmem:[%s334] sm:$0xff] %v778
      %793 = vst [vmem:[%s334 + $0x8] sm:$0xff] %v781
      %794 = vst [vmem:[%s334 + $0x10] sm:$0xff] %v786
      %795 = vst [vmem:[%s334 + $0x18] sm:$0xff] %v789
      %s796 = smul.u32 4, %s20
      %p797 = scmp.lt.s32.totalorder %s796, 7
      %s798 = scalar_select %p797, %s796, 7
      %s799 = smul.addr %s798, 8
      %s800 = scalar_lea.vmem %s9, %s799
      // Predicated region
      $region57: #{_fwfnn_forward_impl.1} parent=55 // pred_check
        %p801 = pneg %p232
      $region58: #{_fwfnn_forward_impl.1} parent=55 // pred_check_branch
        %803 = sbr.rel (%p801) target = $region60
      $region59: #{_fwfnn_forward_impl.1} parent=55 // pred_region
        %s804 = smul.u32 4, %s20
      $region60: #{_fwfnn_forward_impl.1} parent=55 // pred_fallthru
        _
    $region56: #{_fwfnn_forward_impl.1} parent=5 // pred_fallthru
      _
    %p805 = scmp.le.s32.totalorder 2, %s15
    // Predicated region
    $region61: #{_fwfnn_forward_impl.1} parent=5 // pred_check
      %p806 = pneg %p805
    $region62: #{_fwfnn_forward_impl.1} parent=5 // pred_check_branch
      %808 = sbr.rel (%p806) target = $region64
    $region63: #{_fwfnn_forward_impl.1} parent=5 // pred_region
      %s809 = ssub.s32 %s15, 2
      // Predicated region
      $region65: #{_fwfnn_forward_impl.1} parent=63 // pred_check
        %p810 = pneg %p238
      $region66: #{_fwfnn_forward_impl.1} parent=63 // pred_check_branch
        %812 = sbr.rel (%p810) target = $region68
      $region67: #{_fwfnn_forward_impl.1} parent=63 // pred_region
        %s813 = smul.u32 4, %s21
        %p814 = scmp.lt.s32.totalorder %s813, 7
        %s815 = scalar_select %p814, %s813, 7
        %s816 = smul.addr %s815, 8
        %s817 = scalar_lea.vmem %s9, %s816
      $region68: #{_fwfnn_forward_impl.1} parent=63 // pred_fallthru
        _
    $region64: #{_fwfnn_forward_impl.1} parent=5 // pred_fallthru
      _
  $region6: #{_fwfnn_forward_impl.1} parent=0 // loop_footer
    %s19 = sadd.s32 1, %s15
  $region7: #{_fwfnn_forward_impl.1} parent=0 // loop_footer_branch
    %14 = sbr.rel target = $region3
  $region8: #{_fwfnn_forward_impl.1} parent=0 // loop_exit
    _

// kernel: _fwfnn_forward_impl.1
$region0: #{_fwfnn_forward_impl.1}
  #allocation0 [shape = 'u32[]', space=smem, size = 0x4, offset = 0x4, fixed_abs, tag = 'smem constant byte address 0x4 - core index']
  #allocation1 [shape = 'u32[144,128]{1,0:T(1,128)}', space=vmem, size = 0x12000, scoped, tag = 'internal scratch']
  %s0 = inlined_call_operand.vmem [shape: f32[64,16], index: 0, kind: input, shape index: {}]
  %s1 = inlined_call_operand.vmem [shape: bf16[16,128], index: 1, kind: input, shape index: {}]
  %s2 = inlined_call_operand.vmem [shape: f32[1,128], index: 2, kind: input, shape index: {}]
  %s3 = inlined_call_operand.vmem [shape: bf16[128,128], index: 3, kind: input, shape index: {}]
  %s4 = inlined_call_operand.vmem [shape: f32[1,128], index: 4, kind: input, shape index: {}]
  %s5 = inlined_call_operand.vmem [shape: bf16[128,128], index: 5, kind: input, shape index: {}]
  %s6 = inlined_call_operand.vmem [shape: f32[1,128], index: 6, kind: input, shape index: {}]
  %s7 = inlined_call_operand.vmem [shape: bf16[128,128], index: 7, kind: input, shape index: {}]
  %s8 = inlined_call_operand.vmem [shape: f32[1,128], index: 8, kind: input, shape index: {}]
  %s9 = inlined_call_operand.vmem [shape: f32[64,128], index: 9, kind: output, shape index: {}]
  %s10 = sld [smem:[#allocation0]]
  $region69: #{_fwfnn_forward_impl.1} parent=0
    _
  %s12 = ssub.s32 1, %s10
  %s13 = scalar_select 0, %s12, %s10
  loop: start=0, step=1, limit=4
  $region2: #{_fwfnn_forward_impl.1} parent=0 // loop_pre_header
    _
  $region3: #{_fwfnn_forward_impl.1} parent=0 // loop_header
    %s15 = sphi 0, %s19
    %p16 = scmp.ge.s32.totalorder %s15, 4
    %s25 = sphi 0, %s27
    %s28 = sphi 0, %s25
    %s29 = sphi 0, %s28
    %s45 = sphi 0, %s29
    %s49 = sphi 0, %s49
    %s51 = sphi 0, %s49
    %s52 = sphi 0, %s51
    %s66 = sphi 0, %s52
    %s70 = sphi 0, %s70
    %s72 = sphi 0, %s70
    %s73 = sphi 0, %s72
    %s87 = sphi 0, %s73
    %s91 = sphi 0, %s91
    %s93 = sphi 0, %s91
    %s94 = sphi 0, %s93
    %s108 = sphi 0, %s94
    %s112 = sphi 0, %s112
    %s114 = sphi 0, %s112
    %s115 = sphi 0, %s114
    %s129 = sphi 0, %s115
    %s133 = sphi 0, %s133
    %s135 = sphi 0, %s133
    %s136 = sphi 0, %s135
    %s150 = sphi 0, %s136
    %s154 = sphi 0, %s154
    %s156 = sphi 0, %s154
    %s157 = sphi 0, %s156
    %s171 = sphi 0, %s157
    %s175 = sphi 0, %s175
    %s177 = sphi 0, %s175
    %s178 = sphi 0, %s177
    %s192 = sphi 0, %s178
    %s196 = sphi 0, %s196
    %s198 = sphi 0, %s196
    %s199 = sphi 0, %s198
    %s213 = sphi 0, %s199
    %s219 = sphi 0, %s221
    %s222 = sphi 0, %s219
    %s223 = sphi 0, %s222
    %s239 = sphi 0, %s223
  $region4: #{_fwfnn_forward_impl.1} parent=0 // loop_header_branch
    %18 = sbr.rel (%p16) target = $region8
  $region5: #{_fwfnn_forward_impl.1} parent=0 // loop_body
    %s20 = ssub.s32 %s15, 1
    %s21 = ssub.s32 %s15, 2
    %s22 = sadd.s32 %s15, 1
    %s23 = ssub.s32 %s15, %s22
    %p24 = scmp.eq.s32.totalorder %s23, 0
    %s26 = sadd.s32 %s25, 1
    %s27 = scalar_select %p24, %s25, %s26
    %p30 = pneg %p24
    %p31 = scmp.eq.s32.totalorder %s15, 1
    %p32 = por %p30, %p31
    %p33 = scmp.ne.s32.totalorder %s25, %s28
    %p34 = scmp.eq.s32.totalorder %s15, 0
    %p35 = por %p33, %p34
    %p36 = scmp.ne.s32.totalorder %s25, %s28
    %p37 = scmp.eq.s32.totalorder %s20, 1
    %p38 = por %p36, %p37
    %p39 = scmp.ne.s32.totalorder %s28, %s29
    %p40 = scmp.eq.s32.totalorder %s20, 0
    %p41 = por %p39, %p40
    %p42 = scmp.ne.s32.totalorder %s28, %s29
    %p43 = scmp.eq.s32.totalorder %s21, 1
    %p44 = por %p42, %p43
    %p46 = scmp.ne.s32.totalorder %s29, %s45
    %p47 = scmp.eq.s32.totalorder %s21, 0
    %p48 = por %p46, %p47
    %s50 = sadd.s32 %s49, 1
    %p53 = scmp.eq.s32.totalorder %s15, 1
    %p54 = scmp.ne.s32.totalorder %s49, %s51
    %p55 = scmp.eq.s32.totalorder %s15, 0
    %p56 = por %p54, %p55
    %p57 = scmp.ne.s32.totalorder %s49, %s51
    %p58 = scmp.eq.s32.totalorder %s20, 1
    %p59 = por %p57, %p58
    %p60 = scmp.ne.s32.totalorder %s51, %s52
    %p61 = scmp.eq.s32.totalorder %s20, 0
    %p62 = por %p60, %p61
    %p63 = scmp.ne.s32.totalorder %s51, %s52
    %p64 = scmp.eq.s32.totalorder %s21, 1
    %p65 = por %p63, %p64
    %p67 = scmp.ne.s32.totalorder %s52, %s66
    %p68 = scmp.eq.s32.totalorder %s21, 0
    %p69 = por %p67, %p68
    %s71 = sadd.s32 %s70, 1
    %p74 = scmp.eq.s32.totalorder %s15, 1
    %p75 = scmp.ne.s32.totalorder %s70, %s72
    %p76 = scmp.eq.s32.totalorder %s15, 0
    %p77 = por %p75, %p76
    %p78 = scmp.ne.s32.totalorder %s70, %s72
    %p79 = scmp.eq.s32.totalorder %s20, 1
    %p80 = por %p78, %p79
    %p81 = scmp.ne.s32.totalorder %s72, %s73
    %p82 = scmp.eq.s32.totalorder %s20, 0
    %p83 = por %p81, %p82
    %p84 = scmp.ne.s32.totalorder %s72, %s73
    %p85 = scmp.eq.s32.totalorder %s21, 1
    %p86 = por %p84, %p85
    %p88 = scmp.ne.s32.totalorder %s73, %s87
    %p89 = scmp.eq.s32.totalorder %s21, 0
    %p90 = por %p88, %p89
    %s92 = sadd.s32 %s91, 1
    %p95 = scmp.eq.s32.totalorder %s15, 1
    %p96 = scmp.ne.s32.totalorder %s91, %s93
    %p97 = scmp.eq.s32.totalorder %s15, 0
    %p98 = por %p96, %p97
    %p99 = scmp.ne.s32.totalorder %s91, %s93
    %p100 = scmp.eq.s32.totalorder %s20, 1
    %p101 = por %p99, %p100
    %p102 = scmp.ne.s32.totalorder %s93, %s94
    %p103 = scmp.eq.s32.totalorder %s20, 0
    %p104 = por %p102, %p103
    %p105 = scmp.ne.s32.totalorder %s93, %s94
    %p106 = scmp.eq.s32.totalorder %s21, 1
    %p107 = por %p105, %p106
    %p109 = scmp.ne.s32.totalorder %s94, %s108
    %p110 = scmp.eq.s32.totalorder %s21, 0
    %p111 = por %p109, %p110
    %s113 = sadd.s32 %s112, 1
    %p116 = scmp.eq.s32.totalorder %s15, 1
    %p117 = scmp.ne.s32.totalorder %s112, %s114
    %p118 = scmp.eq.s32.totalorder %s15, 0
    %p119 = por %p117, %p118
    %p120 = scmp.ne.s32.totalorder %s112, %s114
    %p121 = scmp.eq.s32.totalorder %s20, 1
    %p122 = por %p120, %p121
    %p123 = scmp.ne.s32.totalorder %s114, %s115
    %p124 = scmp.eq.s32.totalorder %s20, 0
    %p125 = por %p123, %p124
    %p126 = scmp.ne.s32.totalorder %s114, %s115
    %p127 = scmp.eq.s32.totalorder %s21, 1
    %p128 = por %p126, %p127
    %p130 = scmp.ne.s32.totalorder %s115, %s129
    %p131 = scmp.eq.s32.totalorder %s21, 0
    %p132 = por %p130, %p131
    %s134 = sadd.s32 %s133, 1
    %p137 = scmp.eq.s32.totalorder %s15, 1
    %p138 = scmp.ne.s32.totalorder %s133, %s135
    %p139 = scmp.eq.s32.totalorder %s15, 0
    %p140 = por %p138, %p139
    %p141 = scmp.ne.s32.totalorder %s133, %s135
    %p142 = scmp.eq.s32.totalorder %s20, 1
    %p143 = por %p141, %p142
    %p144 = scmp.ne.s32.totalorder %s135, %s136
    %p145 = scmp.eq.s32.totalorder %s20, 0
    %p146 = por %p144, %p145
    %p147 = scmp.ne.s32.totalorder %s135, %s136
    %p148 = scmp.eq.s32.totalorder %s21, 1
    %p149 = por %p147, %p148
    %p151 = scmp.ne.s32.totalorder %s136, %s150
    %p152 = scmp.eq.s32.totalorder %s21, 0
    %p153 = por %p151, %p152
    %s155 = sadd.s32 %s154, 1
    %p158 = scmp.eq.s32.totalorder %s15, 1
    %p159 = scmp.ne.s32.totalorder %s154, %s156
    %p160 = scmp.eq.s32.totalorder %s15, 0
    %p161 = por %p159, %p160
    %p162 = scmp.ne.s32.totalorder %s154, %s156
    %p163 = scmp.eq.s32.totalorder %s20, 1
    %p164 = por %p162, %p163
    %p165 = scmp.ne.s32.totalorder %s156, %s157
    %p166 = scmp.eq.s32.totalorder %s20, 0
    %p167 = por %p165, %p166
    %p168 = scmp.ne.s32.totalorder %s156, %s157
    %p169 = scmp.eq.s32.totalorder %s21, 1
    %p170 = por %p168, %p169
    %p172 = scmp.ne.s32.totalorder %s157, %s171
    %p173 = scmp.eq.s32.totalorder %s21, 0
    %p174 = por %p172, %p173
    %s176 = sadd.s32 %s175, 1
    %p179 = scmp.eq.s32.totalorder %s15, 1
    %p180 = scmp.ne.s32.totalorder %s175, %s177
    %p181 = scmp.eq.s32.totalorder %s15, 0
    %p182 = por %p180, %p181
    %p183 = scmp.ne.s32.totalorder %s175, %s177
    %p184 = scmp.eq.s32.totalorder %s20, 1
    %p185 = por %p183, %p184
    %p186 = scmp.ne.s32.totalorder %s177, %s178
    %p187 = scmp.eq.s32.totalorder %s20, 0
    %p188 = por %p186, %p187
    %p189 = scmp.ne.s32.totalorder %s177, %s178
    %p190 = scmp.eq.s32.totalorder %s21, 1
    %p191 = por %p189, %p190
    %p193 = scmp.ne.s32.totalorder %s178, %s192
    %p194 = scmp.eq.s32.totalorder %s21, 0
    %p195 = por %p193, %p194
    %s197 = sadd.s32 %s196, 1
    %p200 = scmp.eq.s32.totalorder %s15, 1
    %p201 = scmp.ne.s32.totalorder %s196, %s198
    %p202 = scmp.eq.s32.totalorder %s15, 0
    %p203 = por %p201, %p202
    %p204 = scmp.ne.s32.totalorder %s196, %s198
    %p205 = scmp.eq.s32.totalorder %s20, 1
    %p206 = por %p204, %p205
    %p207 = scmp.ne.s32.totalorder %s198, %s199
    %p208 = scmp.eq.s32.totalorder %s20, 0
    %p209 = por %p207, %p208
    %p210 = scmp.ne.s32.totalorder %s198, %s199
    %p211 = scmp.eq.s32.totalorder %s21, 1
    %p212 = por %p210, %p211
    %p214 = scmp.ne.s32.totalorder %s199, %s213
    %p215 = scmp.eq.s32.totalorder %s21, 0
    %p216 = por %p214, %p215
    %s217 = ssub.s32 %s15, %s22
    %p218 = scmp.eq.s32.totalorder %s217, 0
    %s220 = sadd.s32 %s219, 1
    %s221 = scalar_select %p218, %s219, %s220
    %p224 = pneg %p218
    %p225 = scmp.eq.s32.totalorder %s15, 1
    %p226 = por %p224, %p225
    %p227 = scmp.ne.s32.totalorder %s219, %s222
    %p228 = scmp.eq.s32.totalorder %s15, 0
    %p229 = por %p227, %p228
    %p230 = scmp.ne.s32.totalorder %s219, %s222
    %p231 = scmp.eq.s32.totalorder %s20, 1
    %p232 = por %p230, %p231
    %p233 = scmp.ne.s32.totalorder %s222, %s223
    %p234 = scmp.eq.s32.totalorder %s20, 0
    %p235 = por %p233, %p234
    %p236 = scmp.ne.s32.totalorder %s222, %s223
    %p237 = scmp.eq.s32.totalorder %s21, 1
    %p238 = por %p236, %p237
    %p240 = scmp.ne.s32.totalorder %s223, %s239
    %p241 = scmp.eq.s32.totalorder %s21, 0
    %p242 = por %p240, %p241
    %p243 = scmp.le.s32.totalorder 1, %s15
    %p244 = scmp.lt.s32.totalorder %s15, 3
    %p245 = pnand %p243, %p244
    %p246 = pneg %p245
    // Predicated region
    $region9: #{_fwfnn_forward_impl.1} parent=5 // pred_check
      _
    $region10: #{_fwfnn_forward_impl.1} parent=5 // pred_check_branch
      %248 = sbr.rel (%p245) target = $region12
    $region11: #{_fwfnn_forward_impl.1} parent=5 // pred_region
      %s249 = ssub.s32 %s15, 1
      // Predicated region
      $region13: #{_fwfnn_forward_impl.1} parent=11 // pred_check
        %p250 = pneg %p62
      $region14: #{_fwfnn_forward_impl.1} parent=11 // pred_check_branch
        %252 = sbr.rel (%p250) target = $region16
      $region15: #{_fwfnn_forward_impl.1} parent=11 // pred_region
        _
      $region16: #{_fwfnn_forward_impl.1} parent=11 // pred_fallthru
        _
      // Predicated region
      $region17: #{_fwfnn_forward_impl.1} parent=11 // pred_check
        %p253 = pneg %p83
      $region18: #{_fwfnn_forward_impl.1} parent=11 // pred_check_branch
        %255 = sbr.rel (%p253) target = $region20
      $region19: #{_fwfnn_forward_impl.1} parent=11 // pred_region
        _
      $region20: #{_fwfnn_forward_impl.1} parent=11 // pred_fallthru
        _
      // Predicated region
      $region21: #{_fwfnn_forward_impl.1} parent=11 // pred_check
        %p256 = pneg %p104
      $region22: #{_fwfnn_forward_impl.1} parent=11 // pred_check_branch
        %258 = sbr.rel (%p256) target = $region24
      $region23: #{_fwfnn_forward_impl.1} parent=11 // pred_region
        _
      $region24: #{_fwfnn_forward_impl.1} parent=11 // pred_fallthru
        _
      // Predicated region
      $region25: #{_fwfnn_forward_impl.1} parent=11 // pred_check
        %p259 = pneg %p125
      $region26: #{_fwfnn_forward_impl.1} parent=11 // pred_check_branch
        %261 = sbr.rel (%p259) target = $region28
      $region27: #{_fwfnn_forward_impl.1} parent=11 // pred_region
        _
      $region28: #{_fwfnn_forward_impl.1} parent=11 // pred_fallthru
        _
      // Predicated region
      $region29: #{_fwfnn_forward_impl.1} parent=11 // pred_check
        %p262 = pneg %p146
      $region30: #{_fwfnn_forward_impl.1} parent=11 // pred_check_branch
        %264 = sbr.rel (%p262) target = $region32
      $region31: #{_fwfnn_forward_impl.1} parent=11 // pred_region
        _
      $region32: #{_fwfnn_forward_impl.1} parent=11 // pred_fallthru
        _
      // Predicated region
      $region33: #{_fwfnn_forward_impl.1} parent=11 // pred_check
        %p265 = pneg %p167
      $region34: #{_fwfnn_forward_impl.1} parent=11 // pred_check_branch
        %267 = sbr.rel (%p265) target = $region36
      $region35: #{_fwfnn_forward_impl.1} parent=11 // pred_region
        _
      $region36: #{_fwfnn_forward_impl.1} parent=11 // pred_fallthru
        _
      // Predicated region
      $region37: #{_fwfnn_forward_impl.1} parent=11 // pred_check
        %p268 = pneg %p188
      $region38: #{_fwfnn_forward_impl.1} parent=11 // pred_check_branch
        %270 = sbr.rel (%p268) target = $region40
      $region39: #{_fwfnn_forward_impl.1} parent=11 // pred_region
        _
      $region40: #{_fwfnn_forward_impl.1} parent=11 // pred_fallthru
        _
      // Predicated region
      $region41: #{_fwfnn_forward_impl.1} parent=11 // pred_check
        %p271 = pneg %p209
      $region42: #{_fwfnn_forward_impl.1} parent=11 // pred_check_branch
        %273 = sbr.rel (%p271) target = $region44
      $region43: #{_fwfnn_forward_impl.1} parent=11 // pred_region
        _
      $region44: #{_fwfnn_forward_impl.1} parent=11 // pred_fallthru
        _
    $region12: #{_fwfnn_forward_impl.1} parent=5 // pred_fallthru
      _
    %p274 = scmp.lt.s32.totalorder %s15, 2
    // Predicated region
    $region45: #{_fwfnn_forward_impl.1} parent=5 // pred_check
      %p275 = pneg %p274
    $region46: #{_fwfnn_forward_impl.1} parent=5 // pred_check_branch
      %277 = sbr.rel (%p275) target = $region48
    $region47: #{_fwfnn_forward_impl.1} parent=5 // pred_region
      // Predicated region
      $region49: #{_fwfnn_forward_impl.1} parent=47 // pred_check
        %p278 = pneg %p35
      $region50: #{_fwfnn_forward_impl.1} parent=47 // pred_check_branch
        %280 = sbr.rel (%p278) target = $region52
      $region51: #{_fwfnn_forward_impl.1} parent=47 // pred_region
        %s281 = smul.u32 4, %s15
        %p282 = scmp.lt.s32.totalorder %s281, 7
        %s283 = scalar_select %p282, %s281, 7
        %s284 = smul.addr %s283, 8
        %s285 = scalar_lea.vmem %s0, %s284
        %s286 = smul.u32 4, %s15
      $region52: #{_fwfnn_forward_impl.1} parent=47 // pred_fallthru
        _
    $region48: #{_fwfnn_forward_impl.1} parent=5 // pred_fallthru
      _
    %p287 = scmp.le.s32.totalorder 1, %s15
    %p288 = scmp.lt.s32.totalorder %s15, 3
    %p289 = pnand %p287, %p288
    %p290 = pneg %p289
    // Predicated region
    $region53: #{_fwfnn_forward_impl.1} parent=5 // pred_check
      _
    $region54: #{_fwfnn_forward_impl.1} parent=5 // pred_check_branch
      %292 = sbr.rel (%p289) target = $region56
    $region55: #{_fwfnn_forward_impl.1} parent=5 // pred_region
      %s293 = ssub.s32 %s15, 1
      %s294 = smul.u32 4, %s20
      %p295 = scmp.lt.s32.totalorder %s294, 7
      %s296 = scalar_select %p295, %s294, 7
      %s297 = smul.addr %s296, 8
      %s298 = scalar_lea.vmem %s0, %s297
      %p299 = pneg %p41
      %p300 = pneg %p38
      %p301 = pneg %p62
      %p302 = pneg %p59
      %p303 = pneg %p83
      %p304 = pneg %p80
      %p305 = pneg %p104
      %p306 = pneg %p101
      %p307 = pneg %p125
      %p308 = pneg %p122
      %p309 = pneg %p146
      %p310 = pneg %p143
      %p311 = pneg %p167
      %p312 = pneg %p164
      %p313 = pneg %p188
      %p314 = pneg %p185
      %p315 = pneg %p209
      %p316 = pneg %p206
      %p317 = pneg %p235
      %p318 = pneg %p232
      %s319 = smul.u32 4, %s20
      %p320 = scmp.lt.s32.totalorder %s319, 7
      %s321 = scalar_select %p320, %s319, 7
      %s322 = smul.addr %s321, 8
      %s323 = scalar_lea.vmem %s9, %s322
      %s324 = smul.u32 4, %s20
      %p325 = scmp.lt.s32.totalorder %s324, 7
      %s326 = scalar_select %p325, %s324, 7
      %s327 = smul.addr %s326, 8
      %s328 = scalar_lea.vmem %s0, %s327
      %s329 = smul.u32 4, %s20
      %s330 = smul.u32 4, %s20
      %p331 = scmp.lt.s32.totalorder %s330, 7
      %s332 = scalar_select %p331, %s330, 7
      %s333 = smul.addr %s332, 8
      %s334 = scalar_lea.vmem %s9, %s333
      %s335 = smul.u32 4, %s20
      %v337 = vld [vmem:[%s328] sm:$0xff]
      %v338 = vld [vmem:[%s328 + $0x8] sm:$0xff]
      %v339 = vld [vmem:[%s328 + $0x10] sm:$0xff]
      %v340 = vld [vmem:[%s328 + $0x18] sm:$0xff]
      %v341 = vpack.c.bf16 %v338, %v337
      %v342 = vpack.c.bf16 %v340, %v339
      %v343 = vld [vmem:[%s1] sm:$0xf]
      %v344 = vld [vmem:[%s1 + $0x4] sm:$0xf]
      %v345 = vld [vmem:[%s2] sm:$0x1]
      %v347 = vlaneseq
      %v348 = vshrl.u32 %v347, 7
      %v349 = vsub.s32 0, %v348
      %v350 = vrot.slane %v345, %v349
      %v354 = vunpack.c.l.b16 %v343
      %v355 = vunpack.c.l.b16 %v344
      %v356 = vpack.c.b16 %v355, %v354
      %vm358 = vcmask 130048
      %v360 = vsel %vm358, %v341, 0
      %v363 = vsel %vm358, %v342, 0
      %365 = vmatprep.subr.bf16.mxu0 0
      %366 = vmatpush1.bf16.msra.mxu0 %v356
      %367 = vmatprep.subr.bf16.mxu0 0
      %368 = vmatpush1.bf16.msra.mxu0 0
      %369 = vmatprep.subr.bf16.mxu0 0
      %370 = vmatpush1.bf16.msra.mxu0 0
      %371 = vmatprep.subr.bf16.mxu0 0
      %372 = vmatpush1.bf16.msra.mxu0 0
      %373 = vmatprep.subr.bf16.mxu0 0
      %374 = vmatpush1.bf16.msra.mxu0 0
      %375 = vmatprep.subr.bf16.mxu0 0
      %376 = vmatpush1.bf16.msra.mxu0 0
      %377 = vmatprep.subr.bf16.mxu0 0
      %378 = vmatpush1.bf16.msra.mxu0 0
      %379 = vmatprep.subr.bf16.mxu0 0
      %380 = vmatpush1.bf16.msra.mxu0 0
      %381 = vmatprep.subr.bf16.mxu0 0
      %382 = vmatpush1.bf16.msra.mxu0 0
      %383 = vmatprep.subr.bf16.mxu0 0
      %384 = vmatpush1.bf16.msra.mxu0 0
      %385 = vmatprep.subr.bf16.mxu0 0
      %386 = vmatpush1.bf16.msra.mxu0 0
      %387 = vmatprep.subr.bf16.mxu0 0
      %388 = vmatpush1.bf16.msra.mxu0 0
      %389 = vmatprep.subr.bf16.mxu0 0
      %390 = vmatpush1.bf16.msra.mxu0 0
      %391 = vmatprep.subr.bf16.mxu0 0
      %392 = vmatpush1.bf16.msra.mxu0 0
      %393 = vmatprep.subr.bf16.mxu0 0
      %394 = vmatpush1.bf16.msra.mxu0 0
      %395 = vmatprep.subr.bf16.mxu0 0
      %396 = vmatpush1.bf16.msra.mxu0 0
      %397 = vmatprep.mubr.bf16.mxu0 0
      %398 = vmatmul.mubr.bf16.gmra.mrb[0].mxu0 %v360
      %v399 = vpop.f32.mrb[0].mxu0
      %v400 = vadd.f32 %v350, %v399
      %v401 = vpop.f32.mrb[0].mxu0
      %v402 = vpop.f32.mrb[0].mxu0
      %v403 = vadd.f32 %v350, %v402
      %v404 = vpop.f32.mrb[0].mxu0
      %405 = vmatprep.mubr.bf16.mxu0 0
      %406 = vmatmul.mubr.bf16.gmra.mrb[0].mxu0 %v363
      %v407 = vpop.f32.mrb[0].mxu0
      %v408 = vadd.f32 %v350, %v407
      %v409 = vpop.f32.mrb[0].mxu0
      %v410 = vpop.f32.mrb[0].mxu0
      %v411 = vadd.f32 %v350, %v410
      %v412 = vpop.f32.mrb[0].mxu0
      %413 = vdwg.mxu0
      %v414 = vmax.f32 %v400, 0.0
      %v415 = vmax.f32 %v403, 0.0
      %v416 = vmax.f32 %v408, 0.0
      %v417 = vmax.f32 %v411, 0.0
      %v418 = vpack.c.bf16 %v415, %v414
      %v419 = vpack.c.bf16 %v417, %v416
      %v420 = vld [vmem:[%s3] sm:$0xf]
      %v421 = vld [vmem:[%s3 + $0x4] sm:$0xf]
      %v422 = vld [vmem:[%s3 + $0x8] sm:$0xf]
      %v423 = vld [vmem:[%s3 + $0xc] sm:$0xf]
      %v424 = vld [vmem:[%s3 + $0x10] sm:$0xf]
      %v425 = vld [vmem:[%s3 + $0x14] sm:$0xf]
      %v426 = vld [vmem:[%s3 + $0x18] sm:$0xf]
      %v427 = vld [vmem:[%s3 + $0x1c] sm:$0xf]
      %v428 = vld [vmem:[%s3 + $0x20] sm:$0xf]
      %v429 = vld [vmem:[%s3 + $0x24] sm:$0xf]
      %v430 = vld [vmem:[%s3 + $0x28] sm:$0xf]
      %v431 = vld [vmem:[%s3 + $0x2c] sm:$0xf]
      %v432 = vld [vmem:[%s3 + $0x30] sm:$0xf]
      %v433 = vld [vmem:[%s3 + $0x34] sm:$0xf]
      %v434 = vld [vmem:[%s3 + $0x38] sm:$0xf]
      %v435 = vld [vmem:[%s3 + $0x3c] sm:$0xf]
      %v436 = vld [vmem:[%s4] sm:$0x1]
      %v438 = vlaneseq
      %v439 = vshrl.u32 %v438, 7
      %v440 = vsub.s32 0, %v439
      %v441 = vrot.slane %v436, %v440
      %v459 = vunpack.c.l.b16 %v420
      %v460 = vunpack.c.l.b16 %v421
      %v461 = vunpack.c.l.b16 %v422
      %v462 = vunpack.c.l.b16 %v423
      %v463 = vunpack.c.l.b16 %v424
      %v464 = vunpack.c.l.b16 %v425
      %v465 = vunpack.c.l.b16 %v426
      %v466 = vunpack.c.l.b16 %v427
      %v467 = vunpack.c.l.b16 %v428
      %v468 = vunpack.c.l.b16 %v429
      %v469 = vunpack.c.l.b16 %v430
      %v470 = vunpack.c.l.b16 %v431
      %v471 = vunpack.c.l.b16 %v432
      %v472 = vunpack.c.l.b16 %v433
      %v473 = vunpack.c.l.b16 %v434
      %v474 = vunpack.c.l.b16 %v435
      %v475 = vpack.c.b16 %v460, %v459
      %v476 = vpack.c.b16 %v462, %v461
      %v477 = vpack.c.b16 %v464, %v463
      %v478 = vpack.c.b16 %v466, %v465
      %v479 = vpack.c.b16 %v468, %v467
      %v480 = vpack.c.b16 %v470, %v469
      %v481 = vpack.c.b16 %v472, %v471
      %v482 = vpack.c.b16 %v474, %v473
      %491 = vmatprep.subr.bf16.mxu0 0
      %492 = vmatpush1.bf16.msra.mxu0 %v475
      %493 = vmatprep.subr.bf16.mxu0 0
      %494 = vmatpush1.bf16.msra.mxu0 %v476
      %495 = vmatprep.subr.bf16.mxu0 0
      %496 = vmatpush1.bf16.msra.mxu0 %v477
      %497 = vmatprep.subr.bf16.mxu0 0
      %498 = vmatpush1.bf16.msra.mxu0 %v478
      %499 = vmatprep.subr.bf16.mxu0 0
      %500 = vmatpush1.bf16.msra.mxu0 %v479
      %501 = vmatprep.subr.bf16.mxu0 0
      %502 = vmatpush1.bf16.msra.mxu0 %v480
      %503 = vmatprep.subr.bf16.mxu0 0
      %504 = vmatpush1.bf16.msra.mxu0 %v481
      %505 = vmatprep.subr.bf16.mxu0 0
      %506 = vmatpush1.bf16.msra.mxu0 %v482
      %507 = vmatprep.subr.bf16.mxu0 0
      %508 = vmatpush1.bf16.msra.mxu0 0
      %509 = vmatprep.subr.bf16.mxu0 0
      %510 = vmatpush1.bf16.msra.mxu0 0
      %511 = vmatprep.subr.bf16.mxu0 0
      %512 = vmatpush1.bf16.msra.mxu0 0
      %513 = vmatprep.subr.bf16.mxu0 0
      %514 = vmatpush1.bf16.msra.mxu0 0
      %515 = vmatprep.subr.bf16.mxu0 0
      %516 = vmatpush1.bf16.msra.mxu0 0
      %517 = vmatprep.subr.bf16.mxu0 0
      %518 = vmatpush1.bf16.msra.mxu0 0
      %519 = vmatprep.subr.bf16.mxu0 0
      %520 = vmatpush1.bf16.msra.mxu0 0
      %521 = vmatprep.subr.bf16.mxu0 0
      %522 = vmatpush1.bf16.msra.mxu0 0
      %523 = vmatprep.mubr.bf16.mxu0 0
      %524 = vmatmul.mubr.bf16.gmra.mrb[0].mxu0 %v418
      %v525 = vpop.f32.mrb[0].mxu0
      %v526 = vadd.f32 %v441, %v525
      %v527 = vpop.f32.mrb[0].mxu0
      %v528 = vpop.f32.mrb[0].mxu0
      %v529 = vadd.f32 %v441, %v528
      %v530 = vpop.f32.mrb[0].mxu0
      %531 = vmatprep.mubr.bf16.mxu0 0
      %532 = vmatmul.mubr.bf16.gmra.mrb[0].mxu0 %v419
      %v533 = vpop.f32.mrb[0].mxu0
      %v534 = vadd.f32 %v441, %v533
      %v535 = vpop.f32.mrb[0].mxu0
      %v536 = vpop.f32.mrb[0].mxu0
      %v537 = vadd.f32 %v441, %v536
      %v538 = vpop.f32.mrb[0].mxu0
      %539 = vdwg.mxu0
      %v540 = vmax.f32 %v526, 0.0
      %v541 = vmax.f32 %v529, 0.0
      %v542 = vmax.f32 %v534, 0.0
      %v543 = vmax.f32 %v537, 0.0
      %v544 = vpack.c.bf16 %v541, %v540
      %v545 = vpack.c.bf16 %v543, %v542
      %v546 = vld [vmem:[%s5] sm:$0xf]
      %v547 = vld [vmem:[%s5 + $0x4] sm:$0xf]
      %v548 = vld [vmem:[%s5 + $0x8] sm:$0xf]
      %v549 = vld [vmem:[%s5 + $0xc] sm:$0xf]
      %v550 = vld [vmem:[%s5 + $0x10] sm:$0xf]
      %v551 = vld [vmem:[%s5 + $0x14] sm:$0xf]
      %v552 = vld [vmem:[%s5 + $0x18] sm:$0xf]
      %v553 = vld [vmem:[%s5 + $0x1c] sm:$0xf]
      %v554 = vld [vmem:[%s5 + $0x20] sm:$0xf]
      %v555 = vld [vmem:[%s5 + $0x24] sm:$0xf]
      %v556 = vld [vmem:[%s5 + $0x28] sm:$0xf]
      %v557 = vld [vmem:[%s5 + $0x2c] sm:$0xf]
      %v558 = vld [vmem:[%s5 + $0x30] sm:$0xf]
      %v559 = vld [vmem:[%s5 + $0x34] sm:$0xf]
      %v560 = vld [vmem:[%s5 + $0x38] sm:$0xf]
      %v561 = vld [vmem:[%s5 + $0x3c] sm:$0xf]
      %v562 = vld [vmem:[%s6] sm:$0x1]
      %v564 = vlaneseq
      %v565 = vshrl.u32 %v564, 7
      %v566 = vsub.s32 0, %v565
      %v567 = vrot.slane %v562, %v566
      %v585 = vunpack.c.l.b16 %v546
      %v586 = vunpack.c.l.b16 %v547
      %v587 = vunpack.c.l.b16 %v548
      %v588 = vunpack.c.l.b16 %v549
      %v589 = vunpack.c.l.b16 %v550
      %v590 = vunpack.c.l.b16 %v551
      %v591 = vunpack.c.l.b16 %v552
      %v592 = vunpack.c.l.b16 %v553
      %v593 = vunpack.c.l.b16 %v554
      %v594 = vunpack.c.l.b16 %v555
      %v595 = vunpack.c.l.b16 %v556
      %v596 = vunpack.c.l.b16 %v557
      %v597 = vunpack.c.l.b16 %v558
      %v598 = vunpack.c.l.b16 %v559
      %v599 = vunpack.c.l.b16 %v560
      %v600 = vunpack.c.l.b16 %v561
      %v601 = vpack.c.b16 %v586, %v585
      %v602 = vpack.c.b16 %v588, %v587
      %v603 = vpack.c.b16 %v590, %v589
      %v604 = vpack.c.b16 %v592, %v591
      %v605 = vpack.c.b16 %v594, %v593
      %v606 = vpack.c.b16 %v596, %v595
      %v607 = vpack.c.b16 %v598, %v597
      %v608 = vpack.c.b16 %v600, %v599
      %617 = vmatprep.subr.bf16.mxu0 0
      %618 = vmatpush1.bf16.msra.mxu0 %v601
      %619 = vmatprep.subr.bf16.mxu0 0
      %620 = vmatpush1.bf16.msra.mxu0 %v602
      %621 = vmatprep.subr.bf16.mxu0 0
      %622 = vmatpush1.bf16.msra.mxu0 %v603
      %623 = vmatprep.subr.bf16.mxu0 0
      %624 = vmatpush1.bf16.msra.mxu0 %v604
      %625 = vmatprep.subr.bf16.mxu0 0
      %626 = vmatpush1.bf16.msra.mxu0 %v605
      %627 = vmatprep.subr.bf16.mxu0 0
      %628 = vmatpush1.bf16.msra.mxu0 %v606
      %629 = vmatprep.subr.bf16.mxu0 0
      %630 = vmatpush1.bf16.msra.mxu0 %v607
      %631 = vmatprep.subr.bf16.mxu0 0
      %632 = vmatpush1.bf16.msra.mxu0 %v608
      %633 = vmatprep.subr.bf16.mxu0 0
      %634 = vmatpush1.bf16.msra.mxu0 0
      %635 = vmatprep.subr.bf16.mxu0 0
      %636 = vmatpush1.bf16.msra.mxu0 0
      %637 = vmatprep.subr.bf16.mxu0 0
      %638 = vmatpush1.bf16.msra.mxu0 0
      %639 = vmatprep.subr.bf16.mxu0 0
      %640 = vmatpush1.bf16.msra.mxu0 0
      %641 = vmatprep.subr.bf16.mxu0 0
      %642 = vmatpush1.bf16.msra.mxu0 0
      %643 = vmatprep.subr.bf16.mxu0 0
      %644 = vmatpush1.bf16.msra.mxu0 0
      %645 = vmatprep.subr.bf16.mxu0 0
      %646 = vmatpush1.bf16.msra.mxu0 0
      %647 = vmatprep.subr.bf16.mxu0 0
      %648 = vmatpush1.bf16.msra.mxu0 0
      %649 = vmatprep.mubr.bf16.mxu0 0
      %650 = vmatmul.mubr.bf16.gmra.mrb[0].mxu0 %v544
      %v651 = vpop.f32.mrb[0].mxu0
      %v652 = vadd.f32 %v567, %v651
      %v653 = vpop.f32.mrb[0].mxu0
      %v654 = vpop.f32.mrb[0].mxu0
      %v655 = vadd.f32 %v567, %v654
      %v656 = vpop.f32.mrb[0].mxu0
      %657 = vmatprep.mubr.bf16.mxu0 0
      %658 = vmatmul.mubr.bf16.gmra.mrb[0].mxu0 %v545
      %v659 = vpop.f32.mrb[0].mxu0
      %v660 = vadd.f32 %v567, %v659
      %v661 = vpop.f32.mrb[0].mxu0
      %v662 = vpop.f32.mrb[0].mxu0
      %v663 = vadd.f32 %v567, %v662
      %v664 = vpop.f32.mrb[0].mxu0
      %665 = vdwg.mxu0
      %v666 = vmax.f32 %v652, 0.0
      %v667 = vmax.f32 %v655, 0.0
      %v668 = vmax.f32 %v660, 0.0
      %v669 = vmax.f32 %v663, 0.0
      %v670 = vpack.c.bf16 %v667, %v666
      %v671 = vpack.c.bf16 %v669, %v668
      %v672 = vld [vmem:[%s7] sm:$0xf]
      %v673 = vld [vmem:[%s7 + $0x4] sm:$0xf]
      %v674 = vld [vmem:[%s7 + $0x8] sm:$0xf]
      %v675 = vld [vmem:[%s7 + $0xc] sm:$0xf]
      %v676 = vld [vmem:[%s7 + $0x10] sm:$0xf]
      %v677 = vld [vmem:[%s7 + $0x14] sm:$0xf]
      %v678 = vld [vmem:[%s7 + $0x18] sm:$0xf]
      %v679 = vld [vmem:[%s7 + $0x1c] sm:$0xf]
      %v680 = vld [vmem:[%s7 + $0x20] sm:$0xf]
      %v681 = vld [vmem:[%s7 + $0x24] sm:$0xf]
      %v682 = vld [vmem:[%s7 + $0x28] sm:$0xf]
      %v683 = vld [vmem:[%s7 + $0x2c] sm:$0xf]
      %v684 = vld [vmem:[%s7 + $0x30] sm:$0xf]
      %v685 = vld [vmem:[%s7 + $0x34] sm:$0xf]
      %v686 = vld [vmem:[%s7 + $0x38] sm:$0xf]
      %v687 = vld [vmem:[%s7 + $0x3c] sm:$0xf]
      %v688 = vld [vmem:[%s8] sm:$0x1]
      %v690 = vlaneseq
      %v691 = vshrl.u32 %v690, 7
      %v692 = vsub.s32 0, %v691
      %v693 = vrot.slane %v688, %v692
      %v711 = vunpack.c.l.b16 %v672
      %v712 = vunpack.c.l.b16 %v673
      %v713 = vunpack.c.l.b16 %v674
      %v714 = vunpack.c.l.b16 %v675
      %v715 = vunpack.c.l.b16 %v676
      %v716 = vunpack.c.l.b16 %v677
      %v717 = vunpack.c.l.b16 %v678
      %v718 = vunpack.c.l.b16 %v679
      %v719 = vunpack.c.l.b16 %v680
      %v720 = vunpack.c.l.b16 %v681
      %v721 = vunpack.c.l.b16 %v682
      %v722 = vunpack.c.l.b16 %v683
      %v723 = vunpack.c.l.b16 %v684
      %v724 = vunpack.c.l.b16 %v685
      %v725 = vunpack.c.l.b16 %v686
      %v726 = vunpack.c.l.b16 %v687
      %v727 = vpack.c.b16 %v712, %v711
      %v728 = vpack.c.b16 %v714, %v713
      %v729 = vpack.c.b16 %v716, %v715
      %v730 = vpack.c.b16 %v718, %v717
      %v731 = vpack.c.b16 %v720, %v719
      %v732 = vpack.c.b16 %v722, %v721
      %v733 = vpack.c.b16 %v724, %v723
      %v734 = vpack.c.b16 %v726, %v725
      %743 = vmatprep.subr.bf16.mxu0 0
      %744 = vmatpush1.bf16.msra.mxu0 %v727
      %745 = vmatprep.subr.bf16.mxu0 0
      %746 = vmatpush1.bf16.msra.mxu0 %v728
      %747 = vmatprep.subr.bf16.mxu0 0
      %748 = vmatpush1.bf16.msra.mxu0 %v729
      %749 = vmatprep.subr.bf16.mxu0 0
      %750 = vmatpush1.bf16.msra.mxu0 %v730
      %751 = vmatprep.subr.bf16.mxu0 0
      %752 = vmatpush1.bf16.msra.mxu0 %v731
      %753 = vmatprep.subr.bf16.mxu0 0
      %754 = vmatpush1.bf16.msra.mxu0 %v732
      %755 = vmatprep.subr.bf16.mxu0 0
      %756 = vmatpush1.bf16.msra.mxu0 %v733
      %757 = vmatprep.subr.bf16.mxu0 0
      %758 = vmatpush1.bf16.msra.mxu0 %v734
      %759 = vmatprep.subr.bf16.mxu0 0
      %760 = vmatpush1.bf16.msra.mxu0 0
      %761 = vmatprep.subr.bf16.mxu0 0
      %762 = vmatpush1.bf16.msra.mxu0 0
      %763 = vmatprep.subr.bf16.mxu0 0
      %764 = vmatpush1.bf16.msra.mxu0 0
      %765 = vmatprep.subr.bf16.mxu0 0
      %766 = vmatpush1.bf16.msra.mxu0 0
      %767 = vmatprep.subr.bf16.mxu0 0
      %768 = vmatpush1.bf16.msra.mxu0 0
      %769 = vmatprep.subr.bf16.mxu0 0
      %770 = vmatpush1.bf16.msra.mxu0 0
      %771 = vmatprep.subr.bf16.mxu0 0
      %772 = vmatpush1.bf16.msra.mxu0 0
      %773 = vmatprep.subr.bf16.mxu0 0
      %774 = vmatpush1.bf16.msra.mxu0 0
      %775 = vmatprep.mubr.bf16.mxu0 0
      %776 = vmatmul.mubr.bf16.gmra.mrb[0].mxu0 %v670
      %v777 = vpop.f32.mrb[0].mxu0
      %v778 = vadd.f32 %v693, %v777
      %v779 = vpop.f32.mrb[0].mxu0
      %v780 = vpop.f32.mrb[0].mxu0
      %v781 = vadd.f32 %v693, %v780
      %v782 = vpop.f32.mrb[0].mxu0
      %783 = vmatprep.mubr.bf16.mxu0 0
      %784 = vmatmul.mubr.bf16.gmra.mrb[0].mxu0 %v671
      %v785 = vpop.f32.mrb[0].mxu0
      %v786 = vadd.f32 %v693, %v785
      %v787 = vpop.f32.mrb[0].mxu0
      %v788 = vpop.f32.mrb[0].mxu0
      %v789 = vadd.f32 %v693, %v788
      %v790 = vpop.f32.mrb[0].mxu0
      %791 = vdwg.mxu0
      %792 = vst [vmem:[%s334] sm:$0xff] %v778
      %793 = vst [vmem:[%s334 + $0x8] sm:$0xff] %v781
      %794 = vst [vmem:[%s334 + $0x10] sm:$0xff] %v786
      %795 = vst [vmem:[%s334 + $0x18] sm:$0xff] %v789
      %s796 = smul.u32 4, %s20
      %p797 = scmp.lt.s32.totalorder %s796, 7
      %s798 = scalar_select %p797, %s796, 7
      %s799 = smul.addr %s798, 8
      %s800 = scalar_lea.vmem %s9, %s799
      // Predicated region
      $region57: #{_fwfnn_forward_impl.1} parent=55 // pred_check
        %p801 = pneg %p232
      $region58: #{_fwfnn_forward_impl.1} parent=55 // pred_check_branch
        %803 = sbr.rel (%p801) target = $region60
      $region59: #{_fwfnn_forward_impl.1} parent=55 // pred_region
        %s804 = smul.u32 4, %s20
      $region60: #{_fwfnn_forward_impl.1} parent=55 // pred_fallthru
        _
    $region56: #{_fwfnn_forward_impl.1} parent=5 // pred_fallthru
      _
    %p805 = scmp.le.s32.totalorder 2, %s15
    // Predicated region
    $region61: #{_fwfnn_forward_impl.1} parent=5 // pred_check
      %p806 = pneg %p805
    $region62: #{_fwfnn_forward_impl.1} parent=5 // pred_check_branch
      %808 = sbr.rel (%p806) target = $region64
    $region63: #{_fwfnn_forward_impl.1} parent=5 // pred_region
      %s809 = ssub.s32 %s15, 2
      // Predicated region
      $region65: #{_fwfnn_forward_impl.1} parent=63 // pred_check
        %p810 = pneg %p238
      $region66: #{_fwfnn_forward_impl.1} parent=63 // pred_check_branch
        %812 = sbr.rel (%p810) target = $region68
      $region67: #{_fwfnn_forward_impl.1} parent=63 // pred_region
        %s813 = smul.u32 4, %s21
        %p814 = scmp.lt.s32.totalorder %s813, 7
        %s815 = scalar_select %p814, %s813, 7
        %s816 = smul.addr %s815, 8
        %s817 = scalar_lea.vmem %s9, %s816
      $region68: #{_fwfnn_forward_impl.1} parent=63 // pred_fallthru
        _
    $region64: #{_fwfnn_forward_impl.1} parent=5 // pred_fallthru
      _
  $region6: #{_fwfnn_forward_impl.1} parent=0 // loop_footer
    %s19 = sadd.s32 1, %s15
  $region7: #{_fwfnn_forward_impl.1} parent=0 // loop_footer_branch
    %14 = sbr.rel target = $region3
  $region8: #{_fwfnn_forward_impl.1} parent=0 // loop_exit
    _

</llo_original>
